<compile_context>
chip_gen: v6e
topology: v6e:2x2x1
jax: 0.10.0
libtpu: 0.0.40
codegen_flags: <defaults>
</compile_context>

<pallas_src>
import functools
import math

import jax
import jax.numpy as jnp
from jax.experimental import pallas as pl
from jax.experimental.pallas import tpu as pltpu


# ------------------------------- kernel -------------------------------------

def _mha_kernel(*refs, num_heads, d_k, scale, has_mask, has_padmask):
    """Fused MHA for one batch element (all heads).

    Ref order:
      q_ref (1,T,E)  k_ref (1,S,E)  v_ref (1,S,E)
      wq (E,E)  wk (E,E)  wv (E,E)  wo (E,E)       [already transposed: x @ W]
      [mask (T,S)] [pad (1,1,S)]
      o_ref (1,T,E)  w_ref (1,H,T,S)
    """
    it = iter(refs)
    q_ref, k_ref, v_ref = next(it), next(it), next(it)
    wq_ref, wk_ref, wv_ref, wo_ref = next(it), next(it), next(it), next(it)
    mask_ref = next(it) if has_mask else None
    pad_ref = next(it) if has_padmask else None
    o_ref, w_ref = next(it), next(it)

    xq = q_ref[0].astype(jnp.float32)            # (T, E)  lane-dense
    xk = k_ref[0].astype(jnp.float32)            # (S, E)
    xv = v_ref[0].astype(jnp.float32)            # (S, E)
    wq = wq_ref[...].astype(jnp.float32)
    wk = wk_ref[...].astype(jnp.float32)
    wv = wv_ref[...].astype(jnp.float32)
    wo = wo_ref[...].astype(jnp.float32)

    # Q/K/V projections (MXU, f32 accumulation), activations stay in VMEM.
    q = jnp.dot(xq, wq, preferred_element_type=jnp.float32)     # (T, E)
    k = jnp.dot(xk, wk, preferred_element_type=jnp.float32)     # (S, E)
    v = jnp.dot(xv, wv, preferred_element_type=jnp.float32)     # (S, E)

    T, E = q.shape
    S = k.shape[0]
    H, Dh = num_heads, d_k

    if has_mask:
        add_mask = mask_ref[...].astype(jnp.float32)             # (T, S)
    if has_padmask:
        pad = pad_ref[0].astype(jnp.float32)                     # (1, S)

    out_acc = jnp.zeros((T, E), jnp.float32)
    for h in range(H):                                           # static unroll
        sl = slice(h * Dh, (h + 1) * Dh)
        qh, kh, vh = q[:, sl], k[:, sl], v[:, sl]                # (·, Dh)

        # QK^T contracting last dims (MXU consumes K in natural layout).
        s = jax.lax.dot_general(
            qh, kh, (((1,), (1,)), ((), ())),
            preferred_element_type=jnp.float32) * scale          # (T, S)
        if has_mask:
            s = s + add_mask
        if has_padmask:
            s = jnp.where(jnp.broadcast_to(pad, s.shape) > 0.5, -jnp.inf, s)

        # Numerically-stable softmax; one reciprocal per row instead of T*S divs.
        m = jnp.max(s, axis=-1, keepdims=True)
        e = jnp.exp(s - m)
        denom = jnp.sum(e, axis=-1, keepdims=True)
        p = e * (1.0 / denom)                                    # (T, S)

        # TODO(synk): attention dropout (dropout_p) is a no-op here (eval mode).
        w_ref[0, h] = p.astype(w_ref.dtype)

        ctx = jnp.dot(p, vh, preferred_element_type=jnp.float32)  # (T, Dh)
        # Fused output projection: concat_h(ctx_h) @ Wo == sum_h ctx_h @ Wo_rows_h
        out_acc = out_acc + jnp.dot(ctx, wo[sl, :],
                                    preferred_element_type=jnp.float32)

    o_ref[0] = out_acc.astype(o_ref.dtype)


# ------------------------------- wrapper -------------------------------------

def multi_head_attention(query, key, value, params, num_heads,
                         mask=None, padding_mask=None, batch_first=False):
    """Pallas equivalent of MultiHeadAttention.forward (eval mode).

    query: (T, B, E); key/value: (S, B, E) when batch_first=False.
    params: PyTorch-layout (out, in) weights 'w_q','w_k','w_v','w_o'.
    Returns (attn_output (T, B, E), attn_output_weights (B*H, T, S)).
    """
    if batch_first:
        query, key, value = (jnp.swapaxes(x, 0, 1) for x in (query, key, value))
    T, B, E = query.shape
    S = key.shape[0]
    assert E % num_heads == 0
    d_k = E // num_heads
    scale = 1.0 / math.sqrt(d_k)

    # Batch-major, lane-dense (E last) layout for the kernel.
    qb = jnp.transpose(query, (1, 0, 2))       # (B, T, E)
    kb = jnp.transpose(key, (1, 0, 2))         # (B, S, E)
    vb = jnp.transpose(value, (1, 0, 2))       # (B, S, E)

    # Transpose PyTorch (out, in) weights once so the kernel computes x @ W.
    wq_t, wk_t = params["w_q"].T, params["w_k"].T
    wv_t, wo_t = params["w_v"].T, params["w_o"].T

    inputs = [qb, kb, vb, wq_t, wk_t, wv_t, wo_t]
    in_specs = [
        pl.BlockSpec((1, T, E), lambda b: (b, 0, 0)),
        pl.BlockSpec((1, S, E), lambda b: (b, 0, 0)),
        pl.BlockSpec((1, S, E), lambda b: (b, 0, 0)),
        # Constant index maps: weights are DMA'd once, stay VMEM-resident.
        pl.BlockSpec((E, E), lambda b: (0, 0)),
        pl.BlockSpec((E, E), lambda b: (0, 0)),
        pl.BlockSpec((E, E), lambda b: (0, 0)),
        pl.BlockSpec((E, E), lambda b: (0, 0)),
    ]
    if mask is not None:                       # additive (T, S) attn mask
        inputs.append(mask.astype(jnp.float32))
        in_specs.append(pl.BlockSpec((T, S), lambda b: (0, 0)))
    if padding_mask is not None:               # (B, S) bool key-padding mask
        inputs.append(padding_mask.astype(jnp.float32).reshape(B, 1, S))
        in_specs.append(pl.BlockSpec((1, 1, S), lambda b: (b, 0, 0)))

    out_shape = (
        jax.ShapeDtypeStruct((B, T, E), query.dtype),
        jax.ShapeDtypeStruct((B, num_heads, T, S), query.dtype),
    )
    out_specs = (
        pl.BlockSpec((1, T, E), lambda b: (b, 0, 0)),
        pl.BlockSpec((1, num_heads, T, S), lambda b: (b, 0, 0, 0)),
    )

    flops = (2 * B * E * E * (T + 2 * S)            # Q/K/V projections
             + 4 * B * num_heads * T * S * d_k      # QK^T and PV
             + 2 * B * T * E * E)                   # output projection
    bytes_accessed = 4 * (B * T * E + 2 * B * S * E + 4 * E * E
                          + B * T * E + B * num_heads * T * S)
    cost = pl.CostEstimate(flops=flops,
                           transcendentals=B * num_heads * T * S,
                           bytes_accessed=bytes_accessed)

    kernel = functools.partial(
        _mha_kernel, num_heads=num_heads, d_k=d_k, scale=scale,
        has_mask=mask is not None, has_padmask=padding_mask is not None)

    # TODO(synk): for very long sequences add flash-style KV tiling; here one
    # batch element's full (S, E) K/V block is assumed to fit in VMEM.
    attn_bte, weights = pl.pallas_call(
        kernel,
        out_shape=out_shape,
        grid=(B,),
        in_specs=in_specs,
        out_specs=out_specs,
        compiler_params=pltpu.CompilerParams(
            dimension_semantics=("parallel",),      # megacore sharding on v7x
            vmem_limit_bytes=32 * 1024 * 1024),
        cost_estimate=cost,
    )(*inputs)

    attn_out = jnp.transpose(attn_bte, (1, 0, 2))   # back to (T, B, E)
    if batch_first:
        attn_out = jnp.swapaxes(attn_out, 0, 1)
    attn_weights = weights.reshape(B * num_heads, T, S)
    return attn_out, attn_weights


# ------------------------ parameters & pure-JAX reference --------------------

def init_mha_params(key, d_model):
    ks = jax.random.split(key, 4)

    def linear_w(k):  # PyTorch nn.Linear default-ish init, (out, in) layout
        bound = 1.0 / math.sqrt(d_model)
        return jax.random.uniform(k, (d_model, d_model), jnp.float32, -bound, bound)

    return {"w_q": linear_w(ks[0]), "w_k": linear_w(ks[1]),
            "w_v": linear_w(ks[2]), "w_o": linear_w(ks[3])}


def reference_mha(query, key, value, params, num_heads,
                  mask=None, padding_mask=None):
    """Pure-JAX mirror of the PyTorch forward (eval mode) for verification."""
    T, B, E = query.shape
    S = key.shape[0]
    d_k = E // num_heads
    hi = jax.lax.Precision.HIGHEST
    q = jnp.einsum("tbe,fe->tbf", query, params["w_q"], precision=hi)
    k = jnp.einsum("sbe,fe->sbf", key, params["w_k"], precision=hi)
    v = jnp.einsum("sbe,fe->sbf", value, params["w_v"], precision=hi)
    Q = q.reshape(T, B * num_heads, d_k).transpose(1, 0, 2)
    K = k.reshape(S, B * num_heads, d_k).transpose(1, 0, 2)
    V = v.reshape(S, B * num_heads, d_k).transpose(1, 0, 2)
    scores = jnp.einsum("btd,bsd->bts", Q, K, precision=hi) / math.sqrt(d_k)
    if mask is not None:
        scores = scores + mask[None]
    if padding_mask is not None:
        pm = padding_mask.astype(bool)
        scores = scores.reshape(B, num_heads, T, S)
        scores = jnp.where(pm[:, None, None, :], -jnp.inf, scores)
        scores = scores.reshape(B * num_heads, T, S)
    w = jax.nn.softmax(scores, axis=-1)
    attn = jnp.einsum("bts,bsd->btd", w, V, precision=hi)
    attn = attn.transpose(1, 0, 2).reshape(T, B, E)
    out = jnp.einsum("tbe,fe->tbf", attn, params["w_o"], precision=hi)
    return out, w


# ----------------------------------- main ------------------------------------

if __name__ == "__main__":
    T, S, B, E, H = 8, 8, 2, 32, 4         # tgt_len, src_len, batch, d_model, heads

    root = jax.random.PRNGKey(0)
    kq, kk, kv, kp = jax.random.split(root, 4)
    query = jax.random.normal(kq, (T, B, E), jnp.float32)
    key_in = jax.random.normal(kk, (S, B, E), jnp.float32)
    value = jax.random.normal(kv, (S, B, E), jnp.float32)
    params = init_mha_params(kp, E)

    out, attn_w = multi_head_attention(query, key_in, value, params, num_heads=H,
                                       mask=None, padding_mask=None,
                                       batch_first=False)
    out = jax.block_until_ready(out)
    attn_w = jax.block_until_ready(attn_w)

    assert out.shape == (T, B, E) and out.dtype == jnp.float32
    assert attn_w.shape == (B * H, T, S)

    ref_out, ref_w = reference_mha(query, key_in, value, params, H)
    assert jnp.allclose(out, ref_out, atol=2e-3, rtol=2e-3)
    assert jnp.allclose(attn_w, ref_w, atol=2e-3, rtol=2e-3)

    print("KERNEL_OK")
</pallas_src>

<mosaic_0001>
module attributes {stable_mosaic.version = 11 : i64} {
  func.func @_mha_kernel(%arg0: i32, %arg1: memref<1x8x32xf32, #tpu.memory_space<vmem>>, %arg2: memref<1x8x32xf32, #tpu.memory_space<vmem>>, %arg3: memref<1x8x32xf32, #tpu.memory_space<vmem>>, %arg4: memref<32x32xf32, #tpu.memory_space<vmem>>, %arg5: memref<32x32xf32, #tpu.memory_space<vmem>>, %arg6: memref<32x32xf32, #tpu.memory_space<vmem>>, %arg7: memref<32x32xf32, #tpu.memory_space<vmem>>, %arg8: memref<1x8x32xf32, #tpu.memory_space<vmem>>, %arg9: memref<1x4x8x8xf32, #tpu.memory_space<vmem>>) attributes {dimension_semantics = [#tpu.dimension_semantics<parallel>], iteration_bounds = array<i64: 2>, scalar_prefetch = 0 : i64, scratch_operands = 0 : i64, tpu.core_type = #tpu.core_type<tc>, window_params = [{transform_indices = @transform_0, window_bounds = array<i64: 1, 8, 32>}, {transform_indices = @transform_1, window_bounds = array<i64: 1, 8, 32>}, {transform_indices = @transform_2, window_bounds = array<i64: 1, 8, 32>}, {pipeline_mode = #tpu.pipeline_mode<synchronous>, transform_indices = @transform_3, window_bounds = array<i64: 32, 32>}, {pipeline_mode = #tpu.pipeline_mode<synchronous>, transform_indices = @transform_4, window_bounds = array<i64: 32, 32>}, {pipeline_mode = #tpu.pipeline_mode<synchronous>, transform_indices = @transform_5, window_bounds = array<i64: 32, 32>}, {pipeline_mode = #tpu.pipeline_mode<synchronous>, transform_indices = @transform_6, window_bounds = array<i64: 32, 32>}, {transform_indices = @transform_7, window_bounds = array<i64: 1, 8, 32>}, {transform_indices = @transform_8, window_bounds = array<i64: 1, 4, 8, 8>}]} {
    %c0 = arith.constant 0 : index
    %c0_0 = arith.constant 0 : index
    %c0_1 = arith.constant 0 : index
    %0 = vector.load %arg1[%c0, %c0_0, %c0_1] : memref<1x8x32xf32, #tpu.memory_space<vmem>>, vector<1x8x32xf32>
    %1 = vector.shape_cast %0 : vector<1x8x32xf32> to vector<8x32xf32>
    %c0_2 = arith.constant 0 : index
    %c0_3 = arith.constant 0 : index
    %c0_4 = arith.constant 0 : index
    %2 = vector.load %arg2[%c0_2, %c0_3, %c0_4] : memref<1x8x32xf32, #tpu.memory_space<vmem>>, vector<1x8x32xf32>
    %3 = vector.shape_cast %2 : vector<1x8x32xf32> to vector<8x32xf32>
    %c0_5 = arith.constant 0 : index
    %c0_6 = arith.constant 0 : index
    %c0_7 = arith.constant 0 : index
    %4 = vector.load %arg3[%c0_5, %c0_6, %c0_7] : memref<1x8x32xf32, #tpu.memory_space<vmem>>, vector<1x8x32xf32>
    %5 = vector.shape_cast %4 : vector<1x8x32xf32> to vector<8x32xf32>
    %c0_8 = arith.constant 0 : index
    %c0_9 = arith.constant 0 : index
    %6 = vector.load %arg4[%c0_8, %c0_9] : memref<32x32xf32, #tpu.memory_space<vmem>>, vector<32x32xf32>
    %c0_10 = arith.constant 0 : index
    %c0_11 = arith.constant 0 : index
    %7 = vector.load %arg5[%c0_10, %c0_11] : memref<32x32xf32, #tpu.memory_space<vmem>>, vector<32x32xf32>
    %c0_12 = arith.constant 0 : index
    %c0_13 = arith.constant 0 : index
    %8 = vector.load %arg6[%c0_12, %c0_13] : memref<32x32xf32, #tpu.memory_space<vmem>>, vector<32x32xf32>
    %c0_14 = arith.constant 0 : index
    %c0_15 = arith.constant 0 : index
    %9 = vector.load %arg7[%c0_14, %c0_15] : memref<32x32xf32, #tpu.memory_space<vmem>>, vector<32x32xf32>
    %cst = arith.constant dense<0.000000e+00> : vector<8x32xf32>
    %10 = tpu.matmul %1, %6, %cst {dimension_numbers = #tpu.dot_dimension_numbers<[1], [0], [0], [1], [0, 0, 1, 1], [], []>} : vector<8x32xf32>, vector<32x32xf32>, vector<8x32xf32> -> vector<8x32xf32>
    %cst_16 = arith.constant dense<0.000000e+00> : vector<8x32xf32>
    %11 = tpu.matmul %3, %7, %cst_16 {dimension_numbers = #tpu.dot_dimension_numbers<[1], [0], [0], [1], [0, 0, 1, 1], [], []>} : vector<8x32xf32>, vector<32x32xf32>, vector<8x32xf32> -> vector<8x32xf32>
    %cst_17 = arith.constant dense<0.000000e+00> : vector<8x32xf32>
    %12 = tpu.matmul %5, %8, %cst_17 {dimension_numbers = #tpu.dot_dimension_numbers<[1], [0], [0], [1], [0, 0, 1, 1], [], []>} : vector<8x32xf32>, vector<32x32xf32>, vector<8x32xf32> -> vector<8x32xf32>
    %cst_18 = arith.constant 0.000000e+00 : f32
    %13 = vector.broadcast %cst_18 : f32 to vector<8x32xf32>
    %14 = vector.extract_strided_slice %10 {offsets = [0, 0], sizes = [8, 8], strides = [1, 1]} : vector<8x32xf32> to vector<8x8xf32>
    %15 = vector.extract_strided_slice %11 {offsets = [0, 0], sizes = [8, 8], strides = [1, 1]} : vector<8x32xf32> to vector<8x8xf32>
    %16 = vector.extract_strided_slice %12 {offsets = [0, 0], sizes = [8, 8], strides = [1, 1]} : vector<8x32xf32> to vector<8x8xf32>
    %cst_19 = arith.constant dense<0.000000e+00> : vector<8x8xf32>
    %17 = tpu.matmul %14, %15, %cst_19 {dimension_numbers = #tpu.dot_dimension_numbers<[1], [1], [0], [0], [0, 0, 1, 0], [], []>} : vector<8x8xf32>, vector<8x8xf32>, vector<8x8xf32> -> vector<8x8xf32>
    %cst_20 = arith.constant 0.353553385 : f32
    %18 = vector.broadcast %cst_20 : f32 to vector<8x8xf32>
    %19 = arith.mulf %17, %18 : vector<8x8xf32>
    %cst_21 = arith.constant dense<0xFF800000> : vector<8xf32>
    %20 = vector.multi_reduction <maximumf>, %19, %cst_21 [1] : vector<8x8xf32> to vector<8xf32>
    %21 = vector.shape_cast %20 : vector<8xf32> to vector<8x1xf32>
    %22 = vector.broadcast %21 : vector<8x1xf32> to vector<8x8xf32>
    %23 = arith.subf %19, %22 : vector<8x8xf32>
    %24 = math.exp %23 : vector<8x8xf32>
    %cst_22 = arith.constant dense<0.000000e+00> : vector<8xf32>
    %25 = vector.multi_reduction <add>, %24, %cst_22 [1] : vector<8x8xf32> to vector<8xf32>
    %26 = vector.shape_cast %25 : vector<8xf32> to vector<8x1xf32>
    %cst_23 = arith.constant 1.000000e+00 : f32
    %27 = vector.broadcast %cst_23 : f32 to vector<8x1xf32>
    %28 = arith.divf %27, %26 : vector<8x1xf32>
    %29 = vector.broadcast %28 : vector<8x1xf32> to vector<8x8xf32>
    %30 = arith.mulf %24, %29 : vector<8x8xf32>
    %c0_24 = arith.constant 0 : index
    %c0_25 = arith.constant 0 : index
    %c0_26 = arith.constant 0 : index
    %c0_27 = arith.constant 0 : index
    %31 = vector.load %arg9[%c0_24, %c0_25, %c0_26, %c0_27] : memref<1x4x8x8xf32, #tpu.memory_space<vmem>>, vector<1x1x8x8xf32>
    %32 = vector.shape_cast %31 : vector<1x1x8x8xf32> to vector<8x8xf32>
    %33 = vector.shape_cast %30 : vector<8x8xf32> to vector<1x1x8x8xf32>
    tpu.vector_store %arg9[%c0_24, %c0_25, %c0_26, %c0_27], %33 {strides = array<i32>} : memref<1x4x8x8xf32, #tpu.memory_space<vmem>>, vector<1x1x8x8xf32>,
    %cst_28 = arith.constant dense<0.000000e+00> : vector<8x8xf32>
    %34 = tpu.matmul %30, %16, %cst_28 {dimension_numbers = #tpu.dot_dimension_numbers<[1], [0], [0], [1], [0, 0, 1, 1], [], []>} : vector<8x8xf32>, vector<8x8xf32>, vector<8x8xf32> -> vector<8x8xf32>
    %35 = vector.extract_strided_slice %9 {offsets = [0, 0], sizes = [8, 32], strides = [1, 1]} : vector<32x32xf32> to vector<8x32xf32>
    %cst_29 = arith.constant dense<0.000000e+00> : vector<8x32xf32>
    %36 = tpu.matmul %34, %35, %cst_29 {dimension_numbers = #tpu.dot_dimension_numbers<[1], [0], [0], [1], [0, 0, 1, 1], [], []>} : vector<8x8xf32>, vector<8x32xf32>, vector<8x32xf32> -> vector<8x32xf32>
    %37 = arith.addf %13, %36 : vector<8x32xf32>
    %38 = vector.extract_strided_slice %10 {offsets = [0, 8], sizes = [8, 8], strides = [1, 1]} : vector<8x32xf32> to vector<8x8xf32>
    %39 = vector.extract_strided_slice %11 {offsets = [0, 8], sizes = [8, 8], strides = [1, 1]} : vector<8x32xf32> to vector<8x8xf32>
    %40 = vector.extract_strided_slice %12 {offsets = [0, 8], sizes = [8, 8], strides = [1, 1]} : vector<8x32xf32> to vector<8x8xf32>
    %cst_30 = arith.constant dense<0.000000e+00> : vector<8x8xf32>
    %41 = tpu.matmul %38, %39, %cst_30 {dimension_numbers = #tpu.dot_dimension_numbers<[1], [1], [0], [0], [0, 0, 1, 0], [], []>} : vector<8x8xf32>, vector<8x8xf32>, vector<8x8xf32> -> vector<8x8xf32>
    %cst_31 = arith.constant 0.353553385 : f32
    %42 = vector.broadcast %cst_31 : f32 to vector<8x8xf32>
    %43 = arith.mulf %41, %42 : vector<8x8xf32>
    %cst_32 = arith.constant dense<0xFF800000> : vector<8xf32>
    %44 = vector.multi_reduction <maximumf>, %43, %cst_32 [1] : vector<8x8xf32> to vector<8xf32>
    %45 = vector.shape_cast %44 : vector<8xf32> to vector<8x1xf32>
    %46 = vector.broadcast %45 : vector<8x1xf32> to vector<8x8xf32>
    %47 = arith.subf %43, %46 : vector<8x8xf32>
    %48 = math.exp %47 : vector<8x8xf32>
    %cst_33 = arith.constant dense<0.000000e+00> : vector<8xf32>
    %49 = vector.multi_reduction <add>, %48, %cst_33 [1] : vector<8x8xf32> to vector<8xf32>
    %50 = vector.shape_cast %49 : vector<8xf32> to vector<8x1xf32>
    %cst_34 = arith.constant 1.000000e+00 : f32
    %51 = vector.broadcast %cst_34 : f32 to vector<8x1xf32>
    %52 = arith.divf %51, %50 : vector<8x1xf32>
    %53 = vector.broadcast %52 : vector<8x1xf32> to vector<8x8xf32>
    %54 = arith.mulf %48, %53 : vector<8x8xf32>
    %c0_35 = arith.constant 0 : index
    %c1 = arith.constant 1 : index
    %c0_36 = arith.constant 0 : index
    %c0_37 = arith.constant 0 : index
    %55 = vector.load %arg9[%c0_35, %c1, %c0_36, %c0_37] : memref<1x4x8x8xf32, #tpu.memory_space<vmem>>, vector<1x1x8x8xf32>
    %56 = vector.shape_cast %55 : vector<1x1x8x8xf32> to vector<8x8xf32>
    %57 = vector.shape_cast %54 : vector<8x8xf32> to vector<1x1x8x8xf32>
    tpu.vector_store %arg9[%c0_35, %c1, %c0_36, %c0_37], %57 {strides = array<i32>} : memref<1x4x8x8xf32, #tpu.memory_space<vmem>>, vector<1x1x8x8xf32>,
    %cst_38 = arith.constant dense<0.000000e+00> : vector<8x8xf32>
    %58 = tpu.matmul %54, %40, %cst_38 {dimension_numbers = #tpu.dot_dimension_numbers<[1], [0], [0], [1], [0, 0, 1, 1], [], []>} : vector<8x8xf32>, vector<8x8xf32>, vector<8x8xf32> -> vector<8x8xf32>
    %59 = vector.extract_strided_slice %9 {offsets = [8, 0], sizes = [8, 32], strides = [1, 1]} : vector<32x32xf32> to vector<8x32xf32>
    %cst_39 = arith.constant dense<0.000000e+00> : vector<8x32xf32>
    %60 = tpu.matmul %58, %59, %cst_39 {dimension_numbers = #tpu.dot_dimension_numbers<[1], [0], [0], [1], [0, 0, 1, 1], [], []>} : vector<8x8xf32>, vector<8x32xf32>, vector<8x32xf32> -> vector<8x32xf32>
    %61 = arith.addf %37, %60 : vector<8x32xf32>
    %62 = vector.extract_strided_slice %10 {offsets = [0, 16], sizes = [8, 8], strides = [1, 1]} : vector<8x32xf32> to vector<8x8xf32>
    %63 = vector.extract_strided_slice %11 {offsets = [0, 16], sizes = [8, 8], strides = [1, 1]} : vector<8x32xf32> to vector<8x8xf32>
    %64 = vector.extract_strided_slice %12 {offsets = [0, 16], sizes = [8, 8], strides = [1, 1]} : vector<8x32xf32> to vector<8x8xf32>
    %cst_40 = arith.constant dense<0.000000e+00> : vector<8x8xf32>
    %65 = tpu.matmul %62, %63, %cst_40 {dimension_numbers = #tpu.dot_dimension_numbers<[1], [1], [0], [0], [0, 0, 1, 0], [], []>} : vector<8x8xf32>, vector<8x8xf32>, vector<8x8xf32> -> vector<8x8xf32>
    %cst_41 = arith.constant 0.353553385 : f32
    %66 = vector.broadcast %cst_41 : f32 to vector<8x8xf32>
    %67 = arith.mulf %65, %66 : vector<8x8xf32>
    %cst_42 = arith.constant dense<0xFF800000> : vector<8xf32>
    %68 = vector.multi_reduction <maximumf>, %67, %cst_42 [1] : vector<8x8xf32> to vector<8xf32>
    %69 = vector.shape_cast %68 : vector<8xf32> to vector<8x1xf32>
    %70 = vector.broadcast %69 : vector<8x1xf32> to vector<8x8xf32>
    %71 = arith.subf %67, %70 : vector<8x8xf32>
    %72 = math.exp %71 : vector<8x8xf32>
    %cst_43 = arith.constant dense<0.000000e+00> : vector<8xf32>
    %73 = vector.multi_reduction <add>, %72, %cst_43 [1] : vector<8x8xf32> to vector<8xf32>
    %74 = vector.shape_cast %73 : vector<8xf32> to vector<8x1xf32>
    %cst_44 = arith.constant 1.000000e+00 : f32
    %75 = vector.broadcast %cst_44 : f32 to vector<8x1xf32>
    %76 = arith.divf %75, %74 : vector<8x1xf32>
    %77 = vector.broadcast %76 : vector<8x1xf32> to vector<8x8xf32>
    %78 = arith.mulf %72, %77 : vector<8x8xf32>
    %c0_45 = arith.constant 0 : index
    %c2 = arith.constant 2 : index
    %c0_46 = arith.constant 0 : index
    %c0_47 = arith.constant 0 : index
    %79 = vector.load %arg9[%c0_45, %c2, %c0_46, %c0_47] : memref<1x4x8x8xf32, #tpu.memory_space<vmem>>, vector<1x1x8x8xf32>
    %80 = vector.shape_cast %79 : vector<1x1x8x8xf32> to vector<8x8xf32>
    %81 = vector.shape_cast %78 : vector<8x8xf32> to vector<1x1x8x8xf32>
    tpu.vector_store %arg9[%c0_45, %c2, %c0_46, %c0_47], %81 {strides = array<i32>} : memref<1x4x8x8xf32, #tpu.memory_space<vmem>>, vector<1x1x8x8xf32>,
    %cst_48 = arith.constant dense<0.000000e+00> : vector<8x8xf32>
    %82 = tpu.matmul %78, %64, %cst_48 {dimension_numbers = #tpu.dot_dimension_numbers<[1], [0], [0], [1], [0, 0, 1, 1], [], []>} : vector<8x8xf32>, vector<8x8xf32>, vector<8x8xf32> -> vector<8x8xf32>
    %83 = vector.extract_strided_slice %9 {offsets = [16, 0], sizes = [8, 32], strides = [1, 1]} : vector<32x32xf32> to vector<8x32xf32>
    %cst_49 = arith.constant dense<0.000000e+00> : vector<8x32xf32>
    %84 = tpu.matmul %82, %83, %cst_49 {dimension_numbers = #tpu.dot_dimension_numbers<[1], [0], [0], [1], [0, 0, 1, 1], [], []>} : vector<8x8xf32>, vector<8x32xf32>, vector<8x32xf32> -> vector<8x32xf32>
    %85 = arith.addf %61, %84 : vector<8x32xf32>
    %86 = vector.extract_strided_slice %10 {offsets = [0, 24], sizes = [8, 8], strides = [1, 1]} : vector<8x32xf32> to vector<8x8xf32>
    %87 = vector.extract_strided_slice %11 {offsets = [0, 24], sizes = [8, 8], strides = [1, 1]} : vector<8x32xf32> to vector<8x8xf32>
    %88 = vector.extract_strided_slice %12 {offsets = [0, 24], sizes = [8, 8], strides = [1, 1]} : vector<8x32xf32> to vector<8x8xf32>
    %cst_50 = arith.constant dense<0.000000e+00> : vector<8x8xf32>
    %89 = tpu.matmul %86, %87, %cst_50 {dimension_numbers = #tpu.dot_dimension_numbers<[1], [1], [0], [0], [0, 0, 1, 0], [], []>} : vector<8x8xf32>, vector<8x8xf32>, vector<8x8xf32> -> vector<8x8xf32>
    %cst_51 = arith.constant 0.353553385 : f32
    %90 = vector.broadcast %cst_51 : f32 to vector<8x8xf32>
    %91 = arith.mulf %89, %90 : vector<8x8xf32>
    %cst_52 = arith.constant dense<0xFF800000> : vector<8xf32>
    %92 = vector.multi_reduction <maximumf>, %91, %cst_52 [1] : vector<8x8xf32> to vector<8xf32>
    %93 = vector.shape_cast %92 : vector<8xf32> to vector<8x1xf32>
    %94 = vector.broadcast %93 : vector<8x1xf32> to vector<8x8xf32>
    %95 = arith.subf %91, %94 : vector<8x8xf32>
    %96 = math.exp %95 : vector<8x8xf32>
    %cst_53 = arith.constant dense<0.000000e+00> : vector<8xf32>
    %97 = vector.multi_reduction <add>, %96, %cst_53 [1] : vector<8x8xf32> to vector<8xf32>
    %98 = vector.shape_cast %97 : vector<8xf32> to vector<8x1xf32>
    %cst_54 = arith.constant 1.000000e+00 : f32
    %99 = vector.broadcast %cst_54 : f32 to vector<8x1xf32>
    %100 = arith.divf %99, %98 : vector<8x1xf32>
    %101 = vector.broadcast %100 : vector<8x1xf32> to vector<8x8xf32>
    %102 = arith.mulf %96, %101 : vector<8x8xf32>
    %c0_55 = arith.constant 0 : index
    %c3 = arith.constant 3 : index
    %c0_56 = arith.constant 0 : index
    %c0_57 = arith.constant 0 : index
    %103 = vector.load %arg9[%c0_55, %c3, %c0_56, %c0_57] : memref<1x4x8x8xf32, #tpu.memory_space<vmem>>, vector<1x1x8x8xf32>
    %104 = vector.shape_cast %103 : vector<1x1x8x8xf32> to vector<8x8xf32>
    %105 = vector.shape_cast %102 : vector<8x8xf32> to vector<1x1x8x8xf32>
    tpu.vector_store %arg9[%c0_55, %c3, %c0_56, %c0_57], %105 {strides = array<i32>} : memref<1x4x8x8xf32, #tpu.memory_space<vmem>>, vector<1x1x8x8xf32>,
    %cst_58 = arith.constant dense<0.000000e+00> : vector<8x8xf32>
    %106 = tpu.matmul %102, %88, %cst_58 {dimension_numbers = #tpu.dot_dimension_numbers<[1], [0], [0], [1], [0, 0, 1, 1], [], []>} : vector<8x8xf32>, vector<8x8xf32>, vector<8x8xf32> -> vector<8x8xf32>
    %107 = vector.extract_strided_slice %9 {offsets = [24, 0], sizes = [8, 32], strides = [1, 1]} : vector<32x32xf32> to vector<8x32xf32>
    %cst_59 = arith.constant dense<0.000000e+00> : vector<8x32xf32>
    %108 = tpu.matmul %106, %107, %cst_59 {dimension_numbers = #tpu.dot_dimension_numbers<[1], [0], [0], [1], [0, 0, 1, 1], [], []>} : vector<8x8xf32>, vector<8x32xf32>, vector<8x32xf32> -> vector<8x32xf32>
    %109 = arith.addf %85, %108 : vector<8x32xf32>
    %c0_60 = arith.constant 0 : index
    %c0_61 = arith.constant 0 : index
    %c0_62 = arith.constant 0 : index
    %110 = vector.load %arg8[%c0_60, %c0_61, %c0_62] : memref<1x8x32xf32, #tpu.memory_space<vmem>>, vector<1x8x32xf32>
    %111 = vector.shape_cast %110 : vector<1x8x32xf32> to vector<8x32xf32>
    %112 = vector.shape_cast %109 : vector<8x32xf32> to vector<1x8x32xf32>
    tpu.vector_store %arg8[%c0_60, %c0_61, %c0_62], %112 {strides = array<i32>} : memref<1x8x32xf32, #tpu.memory_space<vmem>>, vector<1x8x32xf32>,
    return
  }
  func.func @transform_0(%arg0: i32) -> (i32, i32, i32) {
    %c0_i32 = arith.constant 0 : i32
    %c0_i32_0 = arith.constant 0 : i32
    %c0_i32_1 = arith.constant 0 : i32
    return %arg0, %c0_i32, %c0_i32_0 : i32, i32, i32
  }
  func.func @transform_1(%arg0: i32) -> (i32, i32, i32) {
    %c0_i32 = arith.constant 0 : i32
    %c0_i32_0 = arith.constant 0 : i32
    %c0_i32_1 = arith.constant 0 : i32
    return %arg0, %c0_i32, %c0_i32_0 : i32, i32, i32
  }
  func.func @transform_2(%arg0: i32) -> (i32, i32, i32) {
    %c0_i32 = arith.constant 0 : i32
    %c0_i32_0 = arith.constant 0 : i32
    %c0_i32_1 = arith.constant 0 : i32
    return %arg0, %c0_i32, %c0_i32_0 : i32, i32, i32
  }
  func.func @transform_3(%arg0: i32) -> (i32, i32) {
    %c0_i32 = arith.constant 0 : i32
    %c0_i32_0 = arith.constant 0 : i32
    %c0_i32_1 = arith.constant 0 : i32
    return %c0_i32, %c0_i32_0 : i32, i32
  }
  func.func @transform_4(%arg0: i32) -> (i32, i32) {
    %c0_i32 = arith.constant 0 : i32
    %c0_i32_0 = arith.constant 0 : i32
    %c0_i32_1 = arith.constant 0 : i32
    return %c0_i32, %c0_i32_0 : i32, i32
  }
  func.func @transform_5(%arg0: i32) -> (i32, i32) {
    %c0_i32 = arith.constant 0 : i32
    %c0_i32_0 = arith.constant 0 : i32
    %c0_i32_1 = arith.constant 0 : i32
    return %c0_i32, %c0_i32_0 : i32, i32
  }
  func.func @transform_6(%arg0: i32) -> (i32, i32) {
    %c0_i32 = arith.constant 0 : i32
    %c0_i32_0 = arith.constant 0 : i32
    %c0_i32_1 = arith.constant 0 : i32
    return %c0_i32, %c0_i32_0 : i32, i32
  }
  func.func @transform_7(%arg0: i32) -> (i32, i32, i32) {
    %c0_i32 = arith.constant 0 : i32
    %c0_i32_0 = arith.constant 0 : i32
    %c0_i32_1 = arith.constant 0 : i32
    return %arg0, %c0_i32, %c0_i32_0 : i32, i32, i32
  }
  func.func @transform_8(%arg0: i32) -> (i32, i32, i32, i32) {
    %c0_i32 = arith.constant 0 : i32
    %c0_i32_0 = arith.constant 0 : i32
    %c0_i32_1 = arith.constant 0 : i32
    %c0_i32_2 = arith.constant 0 : i32
    return %arg0, %c0_i32, %c0_i32_0, %c0_i32_1 : i32, i32, i32, i32
  }
}

</mosaic_0001>

<llo_original>
// kernel: tpu_custom_call.1
$region0: #{tpu_custom_call.1}
  #allocation0 [shape = 'u32[]', space=smem, size = 0x4, offset = 0x4, fixed_abs, tag = 'smem constant byte address 0x4 - core index']
  #allocation1 [shape = 'u32[144,128]{1,0:T(1,128)}', space=vmem, size = 0x12000, scoped, tag = 'internal scratch']
  %s0 = inlined_call_operand.hbm [shape: f32[2,8,32], index: 0, kind: input, shape index: {}]
  %s1 = inlined_call_operand.hbm [shape: f32[2,8,32], index: 1, kind: input, shape index: {}]
  %s2 = inlined_call_operand.hbm [shape: f32[2,8,32], index: 2, kind: input, shape index: {}]
  %s3 = inlined_call_operand.hbm [shape: f32[32,32], index: 3, kind: input, shape index: {}]
  %s4 = inlined_call_operand.hbm [shape: f32[32,32], index: 4, kind: input, shape index: {}]
  %s5 = inlined_call_operand.hbm [shape: f32[32,32], index: 5, kind: input, shape index: {}]
  %s6 = inlined_call_operand.hbm [shape: f32[32,32], index: 6, kind: input, shape index: {}]
  %s7 = inlined_call_operand.hbm [shape: f32[2,8,32], index: 7, kind: output, shape index: {0}]
  %s8 = inlined_call_operand.hbm [shape: f32[2,4,8,8], index: 8, kind: output, shape index: {1}]
  %9 = xla_tuple %s7, %s8
  %s10 = sld [smem:[#allocation0]]
  $region97: #{tpu_custom_call.1} parent=0
    _
  %s12 = ssub.s32 1, %s10
  %s13 = scalar_select 0, %s12, %s10
  $region1: #{tpu_custom_call.1} parent=0
    #allocation2 [shape = 'u8[8192]{0}', space=vmem, size = 0x2000, scoped, tag = 'input window, operand 0']
    #allocation3 [shape = 's32[2]{0}', space=sflag, size = 0x8, scoped, tag = 'scoped memory for tpu_custom_call.1']
    #allocation4 [shape = 's32[2]{0}', space=sflag, size = 0x8, scoped, tag = 'scoped memory for tpu_custom_call.1']
    #allocation5 [shape = 'u8[8192]{0}', space=vmem, size = 0x2000, scoped, tag = 'input window, operand 1']
    #allocation6 [shape = 's32[2]{0}', space=sflag, size = 0x8, scoped, tag = 'scoped memory for tpu_custom_call.1']
    #allocation7 [shape = 'u8[8192]{0}', space=vmem, size = 0x2000, scoped, tag = 'input window, operand 2']
    #allocation8 [shape = 'u8[16384]{0}', space=vmem, size = 0x4000, scoped, tag = 'input window, operand 3, single buffered']
    #allocation9 [shape = 's32[1]{0}', space=sflag, size = 0x4, scoped, tag = 'scoped memory for tpu_custom_call.1']
    #allocation10 [shape = 'u8[16384]{0}', space=vmem, size = 0x4000, scoped, tag = 'input window, operand 4, single buffered']
    #allocation11 [shape = 'u8[16384]{0}', space=vmem, size = 0x4000, scoped, tag = 'input window, operand 5, single buffered']
    #allocation12 [shape = 's32[1]{0}', space=sflag, size = 0x4, scoped, tag = 'scoped memory for tpu_custom_call.1']
    #allocation13 [shape = 'u8[16384]{0}', space=vmem, size = 0x4000, scoped, tag = 'input window, operand 6, single buffered']
    #allocation14 [shape = 'u8[8192]{0}', space=vmem, size = 0x2000, scoped, tag = 'output window, operand 0']
    #allocation15 [shape = 'u8[32768]{0}', space=vmem, size = 0x8000, scoped, tag = 'output window, operand 1']
    #allocation16 [shape = 's32[2]{0}', space=sflag, size = 0x8, scoped, tag = 'scoped memory for tpu_custom_call.1']
    %14 = vsyncpa [#allocation3], 0
    %s15 = scalar_lea.sflag [#allocation3], 1
    %16 = vsyncpa %s15, 0
    %17 = vsyncpa [#allocation6], 0
    %s18 = scalar_lea.sflag [#allocation6], 1
    %19 = vsyncpa %s18, 0
    %20 = vsyncpa [#allocation9], 0
    %21 = vsyncpa [#allocation12], 0
    %22 = vsyncpa [#allocation4], 0
    %s23 = scalar_lea.sflag [#allocation4], 1
    %24 = vsyncpa %s23, 0
    %25 = vsyncpa [#allocation16], 0
    %s26 = scalar_lea.sflag [#allocation16], 1
    %27 = vsyncpa %s26, 0
    loop: start=0, step=1, limit=4
    $region2: #{tpu_custom_call.1} parent=1 // loop_pre_header
      _
    $region3: #{tpu_custom_call.1} parent=1 // loop_header
      %s29 = sphi 0, %s33
      %p30 = scmp.ge.s32.totalorder %s29, 4
      %s39 = sphi 0, %s41
      %s42 = sphi 0, %s39
      %s43 = sphi 0, %s42
      %s59 = sphi 0, %s43
      %s65 = sphi 0, %s67
      %s68 = sphi 0, %s65
      %s69 = sphi 0, %s68
      %s85 = sphi 0, %s69
      %s91 = sphi 0, %s93
      %s94 = sphi 0, %s91
      %s95 = sphi 0, %s94
      %s111 = sphi 0, %s95
      %s115 = sphi 0, %s115
      %s117 = sphi 0, %s115
      %s118 = sphi 0, %s117
      %s132 = sphi 0, %s118
      %s136 = sphi 0, %s136
      %s138 = sphi 0, %s136
      %s139 = sphi 0, %s138
      %s153 = sphi 0, %s139
      %s157 = sphi 0, %s157
      %s159 = sphi 0, %s157
      %s160 = sphi 0, %s159
      %s174 = sphi 0, %s160
      %s178 = sphi 0, %s178
      %s180 = sphi 0, %s178
      %s181 = sphi 0, %s180
      %s195 = sphi 0, %s181
      %s201 = sphi 0, %s203
      %s204 = sphi 0, %s201
      %s205 = sphi 0, %s204
      %s221 = sphi 0, %s205
      %s227 = sphi 0, %s229
      %s230 = sphi 0, %s227
      %s231 = sphi 0, %s230
      %s247 = sphi 0, %s231
    $region4: #{tpu_custom_call.1} parent=1 // loop_header_branch
      %32 = sbr.rel (%p30) target = $region8
    $region5: #{tpu_custom_call.1} parent=1 // loop_body
      %s34 = ssub.s32 %s29, 1
      %s35 = ssub.s32 %s29, 2
      %s36 = sadd.s32 %s29, 1
      %s37 = ssub.s32 %s29, %s36
      %p38 = scmp.eq.s32.totalorder %s37, 0
      %s40 = sadd.s32 %s39, 1
      %s41 = scalar_select %p38, %s39, %s40
      %p44 = pneg %p38
      %p45 = scmp.eq.s32.totalorder %s29, 1
      %p46 = por %p44, %p45
      %p47 = scmp.ne.s32.totalorder %s39, %s42
      %p48 = scmp.eq.s32.totalorder %s29, 0
      %p49 = por %p47, %p48
      %p50 = scmp.ne.s32.totalorder %s39, %s42
      %p51 = scmp.eq.s32.totalorder %s34, 1
      %p52 = por %p50, %p51
      %p53 = scmp.ne.s32.totalorder %s42, %s43
      %p54 = scmp.eq.s32.totalorder %s34, 0
      %p55 = por %p53, %p54
      %p56 = scmp.ne.s32.totalorder %s42, %s43
      %p57 = scmp.eq.s32.totalorder %s35, 1
      %p58 = por %p56, %p57
      %p60 = scmp.ne.s32.totalorder %s43, %s59
      %p61 = scmp.eq.s32.totalorder %s35, 0
      %p62 = por %p60, %p61
      %s63 = ssub.s32 %s29, %s36
      %p64 = scmp.eq.s32.totalorder %s63, 0
      %s66 = sadd.s32 %s65, 1
      %s67 = scalar_select %p64, %s65, %s66
      %p70 = pneg %p64
      %p71 = scmp.eq.s32.totalorder %s29, 1
      %p72 = por %p70, %p71
      %p73 = scmp.ne.s32.totalorder %s65, %s68
      %p74 = scmp.eq.s32.totalorder %s29, 0
      %p75 = por %p73, %p74
      %p76 = scmp.ne.s32.totalorder %s65, %s68
      %p77 = scmp.eq.s32.totalorder %s34, 1
      %p78 = por %p76, %p77
      %p79 = scmp.ne.s32.totalorder %s68, %s69
      %p80 = scmp.eq.s32.totalorder %s34, 0
      %p81 = por %p79, %p80
      %p82 = scmp.ne.s32.totalorder %s68, %s69
      %p83 = scmp.eq.s32.totalorder %s35, 1
      %p84 = por %p82, %p83
      %p86 = scmp.ne.s32.totalorder %s69, %s85
      %p87 = scmp.eq.s32.totalorder %s35, 0
      %p88 = por %p86, %p87
      %s89 = ssub.s32 %s29, %s36
      %p90 = scmp.eq.s32.totalorder %s89, 0
      %s92 = sadd.s32 %s91, 1
      %s93 = scalar_select %p90, %s91, %s92
      %p96 = pneg %p90
      %p97 = scmp.eq.s32.totalorder %s29, 1
      %p98 = por %p96, %p97
      %p99 = scmp.ne.s32.totalorder %s91, %s94
      %p100 = scmp.eq.s32.totalorder %s29, 0
      %p101 = por %p99, %p100
      %p102 = scmp.ne.s32.totalorder %s91, %s94
      %p103 = scmp.eq.s32.totalorder %s34, 1
      %p104 = por %p102, %p103
      %p105 = scmp.ne.s32.totalorder %s94, %s95
      %p106 = scmp.eq.s32.totalorder %s34, 0
      %p107 = por %p105, %p106
      %p108 = scmp.ne.s32.totalorder %s94, %s95
      %p109 = scmp.eq.s32.totalorder %s35, 1
      %p110 = por %p108, %p109
      %p112 = scmp.ne.s32.totalorder %s95, %s111
      %p113 = scmp.eq.s32.totalorder %s35, 0
      %p114 = por %p112, %p113
      %s116 = sadd.s32 %s115, 1
      %p119 = scmp.eq.s32.totalorder %s29, 1
      %p120 = scmp.ne.s32.totalorder %s115, %s117
      %p121 = scmp.eq.s32.totalorder %s29, 0
      %p122 = por %p120, %p121
      %p123 = scmp.ne.s32.totalorder %s115, %s117
      %p124 = scmp.eq.s32.totalorder %s34, 1
      %p125 = por %p123, %p124
      %p126 = scmp.ne.s32.totalorder %s117, %s118
      %p127 = scmp.eq.s32.totalorder %s34, 0
      %p128 = por %p126, %p127
      %p129 = scmp.ne.s32.totalorder %s117, %s118
      %p130 = scmp.eq.s32.totalorder %s35, 1
      %p131 = por %p129, %p130
      %p133 = scmp.ne.s32.totalorder %s118, %s132
      %p134 = scmp.eq.s32.totalorder %s35, 0
      %p135 = por %p133, %p134
      %s137 = sadd.s32 %s136, 1
      %p140 = scmp.eq.s32.totalorder %s29, 1
      %p141 = scmp.ne.s32.totalorder %s136, %s138
      %p142 = scmp.eq.s32.totalorder %s29, 0
      %p143 = por %p141, %p142
      %p144 = scmp.ne.s32.totalorder %s136, %s138
      %p145 = scmp.eq.s32.totalorder %s34, 1
      %p146 = por %p144, %p145
      %p147 = scmp.ne.s32.totalorder %s138, %s139
      %p148 = scmp.eq.s32.totalorder %s34, 0
      %p149 = por %p147, %p148
      %p150 = scmp.ne.s32.totalorder %s138, %s139
      %p151 = scmp.eq.s32.totalorder %s35, 1
      %p152 = por %p150, %p151
      %p154 = scmp.ne.s32.totalorder %s139, %s153
      %p155 = scmp.eq.s32.totalorder %s35, 0
      %p156 = por %p154, %p155
      %s158 = sadd.s32 %s157, 1
      %p161 = scmp.eq.s32.totalorder %s29, 1
      %p162 = scmp.ne.s32.totalorder %s157, %s159
      %p163 = scmp.eq.s32.totalorder %s29, 0
      %p164 = por %p162, %p163
      %p165 = scmp.ne.s32.totalorder %s157, %s159
      %p166 = scmp.eq.s32.totalorder %s34, 1
      %p167 = por %p165, %p166
      %p168 = scmp.ne.s32.totalorder %s159, %s160
      %p169 = scmp.eq.s32.totalorder %s34, 0
      %p170 = por %p168, %p169
      %p171 = scmp.ne.s32.totalorder %s159, %s160
      %p172 = scmp.eq.s32.totalorder %s35, 1
      %p173 = por %p171, %p172
      %p175 = scmp.ne.s32.totalorder %s160, %s174
      %p176 = scmp.eq.s32.totalorder %s35, 0
      %p177 = por %p175, %p176
      %s179 = sadd.s32 %s178, 1
      %p182 = scmp.eq.s32.totalorder %s29, 1
      %p183 = scmp.ne.s32.totalorder %s178, %s180
      %p184 = scmp.eq.s32.totalorder %s29, 0
      %p185 = por %p183, %p184
      %p186 = scmp.ne.s32.totalorder %s178, %s180
      %p187 = scmp.eq.s32.totalorder %s34, 1
      %p188 = por %p186, %p187
      %p189 = scmp.ne.s32.totalorder %s180, %s181
      %p190 = scmp.eq.s32.totalorder %s34, 0
      %p191 = por %p189, %p190
      %p192 = scmp.ne.s32.totalorder %s180, %s181
      %p193 = scmp.eq.s32.totalorder %s35, 1
      %p194 = por %p192, %p193
      %p196 = scmp.ne.s32.totalorder %s181, %s195
      %p197 = scmp.eq.s32.totalorder %s35, 0
      %p198 = por %p196, %p197
      %s199 = ssub.s32 %s29, %s36
      %p200 = scmp.eq.s32.totalorder %s199, 0
      %s202 = sadd.s32 %s201, 1
      %s203 = scalar_select %p200, %s201, %s202
      %p206 = pneg %p200
      %p207 = scmp.eq.s32.totalorder %s29, 1
      %p208 = por %p206, %p207
      %p209 = scmp.ne.s32.totalorder %s201, %s204
      %p210 = scmp.eq.s32.totalorder %s29, 0
      %p211 = por %p209, %p210
      %p212 = scmp.ne.s32.totalorder %s201, %s204
      %p213 = scmp.eq.s32.totalorder %s34, 1
      %p214 = por %p212, %p213
      %p215 = scmp.ne.s32.totalorder %s204, %s205
      %p216 = scmp.eq.s32.totalorder %s34, 0
      %p217 = por %p215, %p216
      %p218 = scmp.ne.s32.totalorder %s204, %s205
      %p219 = scmp.eq.s32.totalorder %s35, 1
      %p220 = por %p218, %p219
      %p222 = scmp.ne.s32.totalorder %s205, %s221
      %p223 = scmp.eq.s32.totalorder %s35, 0
      %p224 = por %p222, %p223
      %s225 = ssub.s32 %s29, %s36
      %p226 = scmp.eq.s32.totalorder %s225, 0
      %s228 = sadd.s32 %s227, 1
      %s229 = scalar_select %p226, %s227, %s228
      %p232 = pneg %p226
      %p233 = scmp.eq.s32.totalorder %s29, 1
      %p234 = por %p232, %p233
      %p235 = scmp.ne.s32.totalorder %s227, %s230
      %p236 = scmp.eq.s32.totalorder %s29, 0
      %p237 = por %p235, %p236
      %p238 = scmp.ne.s32.totalorder %s227, %s230
      %p239 = scmp.eq.s32.totalorder %s34, 1
      %p240 = por %p238, %p239
      %p241 = scmp.ne.s32.totalorder %s230, %s231
      %p242 = scmp.eq.s32.totalorder %s34, 0
      %p243 = por %p241, %p242
      %p244 = scmp.ne.s32.totalorder %s230, %s231
      %p245 = scmp.eq.s32.totalorder %s35, 1
      %p246 = por %p244, %p245
      %p248 = scmp.ne.s32.totalorder %s231, %s247
      %p249 = scmp.eq.s32.totalorder %s35, 0
      %p250 = por %p248, %p249
      %p251 = scmp.le.s32.totalorder 1, %s29
      %p252 = scmp.lt.s32.totalorder %s29, 3
      %p253 = pnand %p251, %p252
      %p254 = pneg %p253
      // Predicated region
      $region9: #{tpu_custom_call.1} parent=5 // pred_check
        _
      $region10: #{tpu_custom_call.1} parent=5 // pred_check_branch
        %256 = sbr.rel (%p253) target = $region12
      $region11: #{tpu_custom_call.1} parent=5 // pred_region
        %s257 = ssub.s32 %s29, 1
        // Predicated region
        $region13: #{tpu_custom_call.1} parent=11 // pred_check
          %p258 = pneg %p128
        $region14: #{tpu_custom_call.1} parent=11 // pred_check_branch
          %260 = sbr.rel (%p258) target = $region16
        $region15: #{tpu_custom_call.1} parent=11 // pred_region
          %s262 = ssub.s32 512, 512
          %263 = vsyncadd [#allocation9], %s262
          %s264 = sshll.u32 [#allocation8], 4
          %s265 = int_to_ptr.vmem [resolvable:$true] %s264
          %270 = dma.hbm_to_vmem [thread:$0]  %s3, 512, %s265, [#allocation9], 128, 128, 8
        $region16: #{tpu_custom_call.1} parent=11 // pred_fallthru
          _
        // Predicated region
        $region17: #{tpu_custom_call.1} parent=11 // pred_check
          %p271 = pneg %p149
        $region18: #{tpu_custom_call.1} parent=11 // pred_check_branch
          %273 = sbr.rel (%p271) target = $region20
        $region19: #{tpu_custom_call.1} parent=11 // pred_region
          %s275 = ssub.s32 512, 512
          %276 = vsyncadd [#allocation9], %s275
          %s277 = sshll.u32 [#allocation10], 4
          %s278 = int_to_ptr.vmem [resolvable:$true] %s277
          %283 = dma.hbm_to_vmem [thread:$0]  %s4, 512, %s278, [#allocation9], 128, 128, 8
        $region20: #{tpu_custom_call.1} parent=11 // pred_fallthru
          _
        // Predicated region
        $region21: #{tpu_custom_call.1} parent=11 // pred_check
          %p284 = pneg %p170
        $region22: #{tpu_custom_call.1} parent=11 // pred_check_branch
          %286 = sbr.rel (%p284) target = $region24
        $region23: #{tpu_custom_call.1} parent=11 // pred_region
          %s288 = ssub.s32 512, 512
          %289 = vsyncadd [#allocation12], %s288
          %s290 = sshll.u32 [#allocation11], 4
          %s291 = int_to_ptr.vmem [resolvable:$true] %s290
          %296 = dma.hbm_to_vmem [thread:$0]  %s5, 512, %s291, [#allocation12], 128, 128, 8
        $region24: #{tpu_custom_call.1} parent=11 // pred_fallthru
          _
        // Predicated region
        $region25: #{tpu_custom_call.1} parent=11 // pred_check
          %p297 = pneg %p191
        $region26: #{tpu_custom_call.1} parent=11 // pred_check_branch
          %299 = sbr.rel (%p297) target = $region28
        $region27: #{tpu_custom_call.1} parent=11 // pred_region
          %s301 = ssub.s32 512, 512
          %302 = vsyncadd [#allocation12], %s301
          %s303 = sshll.u32 [#allocation13], 4
          %s304 = int_to_ptr.vmem [resolvable:$true] %s303
          %309 = dma.hbm_to_vmem [thread:$0]  %s6, 512, %s304, [#allocation12], 128, 128, 8
        $region28: #{tpu_custom_call.1} parent=11 // pred_fallthru
          _
      $region12: #{tpu_custom_call.1} parent=5 // pred_fallthru
        _
      %p310 = scmp.lt.s32.totalorder %s29, 2
      // Predicated region
      $region29: #{tpu_custom_call.1} parent=5 // pred_check
        %p311 = pneg %p310
      $region30: #{tpu_custom_call.1} parent=5 // pred_check_branch
        %313 = sbr.rel (%p311) target = $region32
      $region31: #{tpu_custom_call.1} parent=5 // pred_region
        // Predicated region
        $region33: #{tpu_custom_call.1} parent=31 // pred_check
          %p314 = pneg %p49
        $region34: #{tpu_custom_call.1} parent=31 // pred_check_branch
          %316 = sbr.rel (%p314) target = $region36
        $region35: #{tpu_custom_call.1} parent=31 // pred_region
          %s317 = sand.u32 %s39, 1
          %s318 = scalar_lea.sflag [#allocation3], %s317
          %s319 = sand.u32 %s39, 1
          %s320 = smul.addr %s319, 8
          %s321 = scalar_lea.vmem [#allocation2], %s320
          %s323 = ssub.s32 128, 128
          %324 = vsyncadd %s318, %s323
          %s325 = smul.addr %s29, 128
          %s326 = scalar_lea.hbm %s0, %s325
          %s328 = sshll.u32 %s321, 4
          %s329 = int_to_ptr.vmem [resolvable:$true] %s328
          %331 = dma.hbm_to_vmem [thread:$0]  %s326, 128, %s329, %s318
        $region36: #{tpu_custom_call.1} parent=31 // pred_fallthru
          _
        // Predicated region
        $region37: #{tpu_custom_call.1} parent=31 // pred_check
          %p332 = pneg %p75
        $region38: #{tpu_custom_call.1} parent=31 // pred_check_branch
          %334 = sbr.rel (%p332) target = $region40
        $region39: #{tpu_custom_call.1} parent=31 // pred_region
          %s335 = sand.u32 %s29, 1
          %s336 = scalar_lea.sflag [#allocation6], %s335
          %s337 = sand.u32 %s65, 1
          %s338 = smul.addr %s337, 8
          %s339 = scalar_lea.vmem [#allocation5], %s338
          %s341 = ssub.s32 128, 128
          %342 = vsyncadd %s336, %s341
          %s343 = smul.addr %s29, 128
          %s344 = scalar_lea.hbm %s1, %s343
          %s346 = sshll.u32 %s339, 4
          %s347 = int_to_ptr.vmem [resolvable:$true] %s346
          %349 = dma.hbm_to_vmem [thread:$0]  %s344, 128, %s347, %s336
        $region40: #{tpu_custom_call.1} parent=31 // pred_fallthru
          _
        // Predicated region
        $region41: #{tpu_custom_call.1} parent=31 // pred_check
          %p350 = pneg %p101
        $region42: #{tpu_custom_call.1} parent=31 // pred_check_branch
          %352 = sbr.rel (%p350) target = $region44
        $region43: #{tpu_custom_call.1} parent=31 // pred_region
          %s353 = sand.u32 %s29, 1
          %s354 = scalar_lea.sflag [#allocation6], %s353
          %s355 = sand.u32 %s91, 1
          %s356 = smul.addr %s355, 8
          %s357 = scalar_lea.vmem [#allocation7], %s356
          %s359 = ssub.s32 128, 128
          %360 = vsyncadd %s354, %s359
          %s361 = smul.addr %s29, 128
          %s362 = scalar_lea.hbm %s2, %s361
          %s364 = sshll.u32 %s357, 4
          %s365 = int_to_ptr.vmem [resolvable:$true] %s364
          %367 = dma.hbm_to_vmem [thread:$0]  %s362, 128, %s365, %s354
        $region44: #{tpu_custom_call.1} parent=31 // pred_fallthru
          _
      $region32: #{tpu_custom_call.1} parent=5 // pred_fallthru
        _
      %p368 = scmp.le.s32.totalorder 1, %s29
      %p369 = scmp.lt.s32.totalorder %s29, 3
      %p370 = pnand %p368, %p369
      %p371 = pneg %p370
      // Predicated region
      $region45: #{tpu_custom_call.1} parent=5 // pred_check
        _
      $region46: #{tpu_custom_call.1} parent=5 // pred_check_branch
        %373 = sbr.rel (%p370) target = $region48
      $region47: #{tpu_custom_call.1} parent=5 // pred_region
        %s374 = ssub.s32 %s29, 1
        %s375 = sand.u32 %s42, 1
        %s376 = scalar_lea.sflag [#allocation3], %s375
        %s377 = sand.u32 %s42, 1
        %s378 = smul.addr %s377, 8
        %s379 = scalar_lea.vmem [#allocation2], %s378
        // Predicated region
        $region49: #{tpu_custom_call.1} parent=47 // pred_check
          %p380 = pneg %p55
        $region50: #{tpu_custom_call.1} parent=47 // pred_check_branch
          %382 = sbr.rel (%p380) target = $region52
        $region51: #{tpu_custom_call.1} parent=47 // pred_region
          %383 = dma.done %s376, 128
        $region52: #{tpu_custom_call.1} parent=47 // pred_fallthru
          _
        %s384 = sand.u32 %s34, 1
        %s385 = scalar_lea.sflag [#allocation6], %s384
        %s386 = sand.u32 %s68, 1
        %s387 = smul.addr %s386, 8
        %s388 = scalar_lea.vmem [#allocation5], %s387
        // Predicated region
        $region53: #{tpu_custom_call.1} parent=47 // pred_check
          %p389 = pneg %p81
        $region54: #{tpu_custom_call.1} parent=47 // pred_check_branch
          %391 = sbr.rel (%p389) target = $region56
        $region55: #{tpu_custom_call.1} parent=47 // pred_region
          %392 = dma.done %s385, 128
        $region56: #{tpu_custom_call.1} parent=47 // pred_fallthru
          _
        %s393 = sand.u32 %s34, 1
        %s394 = scalar_lea.sflag [#allocation6], %s393
        %s395 = sand.u32 %s94, 1
        %s396 = smul.addr %s395, 8
        %s397 = scalar_lea.vmem [#allocation7], %s396
        // Predicated region
        $region57: #{tpu_custom_call.1} parent=47 // pred_check
          %p398 = pneg %p107
        $region58: #{tpu_custom_call.1} parent=47 // pred_check_branch
          %400 = sbr.rel (%p398) target = $region60
        $region59: #{tpu_custom_call.1} parent=47 // pred_region
          %401 = dma.done %s394, 128
        $region60: #{tpu_custom_call.1} parent=47 // pred_fallthru
          _
        // Predicated region
        $region61: #{tpu_custom_call.1} parent=47 // pred_check
          %p402 = pneg %p128
        $region62: #{tpu_custom_call.1} parent=47 // pred_check_branch
          %404 = sbr.rel (%p402) target = $region64
        $region63: #{tpu_custom_call.1} parent=47 // pred_region
          %405 = dma.done [#allocation9], 512
        $region64: #{tpu_custom_call.1} parent=47 // pred_fallthru
          _
        // Predicated region
        $region65: #{tpu_custom_call.1} parent=47 // pred_check
          %p406 = pneg %p149
        $region66: #{tpu_custom_call.1} parent=47 // pred_check_branch
          %408 = sbr.rel (%p406) target = $region68
        $region67: #{tpu_custom_call.1} parent=47 // pred_region
          %409 = dma.done [#allocation9], 512
        $region68: #{tpu_custom_call.1} parent=47 // pred_fallthru
          _
        // Predicated region
        $region69: #{tpu_custom_call.1} parent=47 // pred_check
          %p410 = pneg %p170
        $region70: #{tpu_custom_call.1} parent=47 // pred_check_branch
          %412 = sbr.rel (%p410) target = $region72
        $region71: #{tpu_custom_call.1} parent=47 // pred_region
          %413 = dma.done [#allocation12], 512
        $region72: #{tpu_custom_call.1} parent=47 // pred_fallthru
          _
        // Predicated region
        $region73: #{tpu_custom_call.1} parent=47 // pred_check
          %p414 = pneg %p191
        $region74: #{tpu_custom_call.1} parent=47 // pred_check_branch
          %416 = sbr.rel (%p414) target = $region76
        $region75: #{tpu_custom_call.1} parent=47 // pred_region
          %417 = dma.done [#allocation12], 512
        $region76: #{tpu_custom_call.1} parent=47 // pred_fallthru
          _
        %s418 = sand.u32 %s42, 1
        %s419 = scalar_lea.sflag [#allocation3], %s418
        %s420 = sand.u32 %s42, 1
        %s421 = smul.addr %s420, 8
        %s422 = scalar_lea.vmem [#allocation2], %s421
        %p423 = pneg %p55
        %p424 = pneg %p52
        %s425 = sand.u32 %s34, 1
        %s426 = scalar_lea.sflag [#allocation6], %s425
        %s427 = sand.u32 %s68, 1
        %s428 = smul.addr %s427, 8
        %s429 = scalar_lea.vmem [#allocation5], %s428
        %p430 = pneg %p81
        %p431 = pneg %p78
        %s432 = sand.u32 %s34, 1
        %s433 = scalar_lea.sflag [#allocation6], %s432
        %s434 = sand.u32 %s94, 1
        %s435 = smul.addr %s434, 8
        %s436 = scalar_lea.vmem [#allocation7], %s435
        %p437 = pneg %p107
        %p438 = pneg %p104
        %p439 = pneg %p128
        %p440 = pneg %p125
        %p441 = pneg %p149
        %p442 = pneg %p146
        %p443 = pneg %p170
        %p444 = pneg %p167
        %p445 = pneg %p191
        %p446 = pneg %p188
        %p447 = pneg %p217
        %p448 = pneg %p214
        %s449 = sand.u32 %s204, 1
        %s450 = scalar_lea.sflag [#allocation4], %s449
        %s451 = sand.u32 %s204, 1
        %s452 = smul.addr %s451, 8
        %s453 = scalar_lea.vmem [#allocation14], %s452
        %p454 = pneg %p243
        %p455 = pneg %p240
        %s456 = sand.u32 %s230, 1
        %s457 = scalar_lea.sflag [#allocation16], %s456
        %s458 = sand.u32 %s230, 1
        %s459 = smul.addr %s458, 32
        %s460 = scalar_lea.vmem [#allocation15], %s459
        %v461 = vld [vmem:[%s379] sm:$0xff]
        %v462 = vld [vmem:[%s388] sm:$0xff]
        %v463 = vld [vmem:[%s397] sm:$0xff]
        %v464 = vld [vmem:[#allocation8] sm:$0xff]
        %v465 = vld [vmem:[#allocation8 + $0x8] sm:$0xff]
        %v466 = vld [vmem:[#allocation8 + $0x10] sm:$0xff]
        %v467 = vld [vmem:[#allocation8 + $0x18] sm:$0xff]
        %v468 = vld [vmem:[#allocation10] sm:$0xff]
        %v469 = vld [vmem:[#allocation10 + $0x8] sm:$0xff]
        %v470 = vld [vmem:[#allocation10 + $0x10] sm:$0xff]
        %v471 = vld [vmem:[#allocation10 + $0x18] sm:$0xff]
        %v472 = vld [vmem:[#allocation11] sm:$0xff]
        %v473 = vld [vmem:[#allocation11 + $0x8] sm:$0xff]
        %v474 = vld [vmem:[#allocation11 + $0x10] sm:$0xff]
        %v475 = vld [vmem:[#allocation11 + $0x18] sm:$0xff]
        %v476 = vld [vmem:[#allocation13] sm:$0xff]
        %v477 = vld [vmem:[#allocation13 + $0x8] sm:$0xff]
        %v478 = vld [vmem:[#allocation13 + $0x10] sm:$0xff]
        %v479 = vld [vmem:[#allocation13 + $0x18] sm:$0xff]
        %vm480 = vcmask 261120
        %v482 = vsel %vm480, %v461, 0
        %484 = vmatprep.subr.mxu0 0.0
        %485 = vmatpush1.msra.mxu0 0.0
        %486 = vmatprep.subr.mxu0 0.0
        %487 = vmatpush1.msra.mxu0 0.0
        %488 = vmatprep.subr.mxu0 0.0
        %489 = vmatpush1.msra.mxu0 0.0
        %490 = vmatprep.subr.mxu0 0.0
        %491 = vmatpush1.msra.mxu0 0.0
        %492 = vmatprep.subr.mxu0 0.0
        %493 = vmatpush1.msra.mxu0 0.0
        %494 = vmatprep.subr.mxu0 0.0
        %495 = vmatpush1.msra.mxu0 0.0
        %496 = vmatprep.subr.mxu0 0.0
        %497 = vmatpush1.msra.mxu0 0.0
        %498 = vmatprep.subr.mxu0 0.0
        %499 = vmatpush1.msra.mxu0 0.0
        %500 = vmatprep.subr.mxu0 0.0
        %501 = vmatpush1.msra.mxu0 0.0
        %502 = vmatprep.subr.mxu0 0.0
        %503 = vmatpush1.msra.mxu0 0.0
        %504 = vmatprep.subr.mxu0 0.0
        %505 = vmatpush1.msra.mxu0 0.0
        %506 = vmatprep.subr.mxu0 0.0
        %507 = vmatpush1.msra.mxu0 0.0
        %508 = vmatprep.subr.mxu0 0.0
        %509 = vmatpush1.msra.mxu0 %v467
        %510 = vmatprep.subr.mxu0 0.0
        %511 = vmatpush1.msra.mxu0 %v466
        %512 = vmatprep.subr.mxu0 0.0
        %513 = vmatpush1.msra.mxu0 %v465
        %514 = vmatprep.subr.mxu0 0.0
        %515 = vmatpush1.msra.mxu0 %v464
        %516 = vmatprep.subr.mxu0 0.0
        %517 = vmatpush2.msra.mxu0 0.0
        %518 = vmatprep.subr.mxu0 0.0
        %519 = vmatpush2.msra.mxu0 0.0
        %520 = vmatprep.subr.mxu0 0.0
        %521 = vmatpush2.msra.mxu0 0.0
        %522 = vmatprep.subr.mxu0 0.0
        %523 = vmatpush2.msra.mxu0 0.0
        %524 = vmatprep.subr.mxu0 0.0
        %525 = vmatpush2.msra.mxu0 0.0
        %526 = vmatprep.subr.mxu0 0.0
        %527 = vmatpush2.msra.mxu0 0.0
        %528 = vmatprep.subr.mxu0 0.0
        %529 = vmatpush2.msra.mxu0 0.0
        %530 = vmatprep.subr.mxu0 0.0
        %531 = vmatpush2.msra.mxu0 0.0
        %532 = vmatprep.subr.mxu0 0.0
        %533 = vmatpush2.msra.mxu0 0.0
        %534 = vmatprep.subr.mxu0 0.0
        %535 = vmatpush2.msra.mxu0 0.0
        %536 = vmatprep.subr.mxu0 0.0
        %537 = vmatpush2.msra.mxu0 0.0
        %538 = vmatprep.subr.mxu0 0.0
        %539 = vmatpush2.msra.mxu0 0.0
        %540 = vmatprep.subr.mxu0 0.0
        %541 = vmatpush2.msra.mxu0 0.0
        %542 = vmatprep.subr.mxu0 0.0
        %543 = vmatpush2.msra.mxu0 0.0
        %544 = vmatprep.subr.mxu0 0.0
        %545 = vmatpush2.msra.mxu0 0.0
        %546 = vmatprep.subr.mxu0 0.0
        %547 = vmatpush2.msra.mxu0 0.0
        %548 = vmatprep.mubr.f32.mxu0 0.0
        %549 = vmatmul.mubr.f32.gmra.mxu0 %v482
        %v550 = vpop.f32.mrf.mxu0
        %v551 = vadd.f32 0.0, %v550
        %v552 = vpop.f32.mrf.mxu0
        %553 = vdwg.mxu0
        %v555 = vsel %vm480, %v462, 0
        %557 = vmatprep.subr.mxu0 0.0
        %558 = vmatpush1.msra.mxu0 0.0
        %559 = vmatprep.subr.mxu0 0.0
        %560 = vmatpush1.msra.mxu0 0.0
        %561 = vmatprep.subr.mxu0 0.0
        %562 = vmatpush1.msra.mxu0 0.0
        %563 = vmatprep.subr.mxu0 0.0
        %564 = vmatpush1.msra.mxu0 0.0
        %565 = vmatprep.subr.mxu0 0.0
        %566 = vmatpush1.msra.mxu0 0.0
        %567 = vmatprep.subr.mxu0 0.0
        %568 = vmatpush1.msra.mxu0 0.0
        %569 = vmatprep.subr.mxu0 0.0
        %570 = vmatpush1.msra.mxu0 0.0
        %571 = vmatprep.subr.mxu0 0.0
        %572 = vmatpush1.msra.mxu0 0.0
        %573 = vmatprep.subr.mxu0 0.0
        %574 = vmatpush1.msra.mxu0 0.0
        %575 = vmatprep.subr.mxu0 0.0
        %576 = vmatpush1.msra.mxu0 0.0
        %577 = vmatprep.subr.mxu0 0.0
        %578 = vmatpush1.msra.mxu0 0.0
        %579 = vmatprep.subr.mxu0 0.0
        %580 = vmatpush1.msra.mxu0 0.0
        %581 = vmatprep.subr.mxu0 0.0
        %582 = vmatpush1.msra.mxu0 %v471
        %583 = vmatprep.subr.mxu0 0.0
        %584 = vmatpush1.msra.mxu0 %v470
        %585 = vmatprep.subr.mxu0 0.0
        %586 = vmatpush1.msra.mxu0 %v469
        %587 = vmatprep.subr.mxu0 0.0
        %588 = vmatpush1.msra.mxu0 %v468
        %589 = vmatprep.subr.mxu0 0.0
        %590 = vmatpush2.msra.mxu0 0.0
        %591 = vmatprep.subr.mxu0 0.0
        %592 = vmatpush2.msra.mxu0 0.0
        %593 = vmatprep.subr.mxu0 0.0
        %594 = vmatpush2.msra.mxu0 0.0
        %595 = vmatprep.subr.mxu0 0.0
        %596 = vmatpush2.msra.mxu0 0.0
        %597 = vmatprep.subr.mxu0 0.0
        %598 = vmatpush2.msra.mxu0 0.0
        %599 = vmatprep.subr.mxu0 0.0
        %600 = vmatpush2.msra.mxu0 0.0
        %601 = vmatprep.subr.mxu0 0.0
        %602 = vmatpush2.msra.mxu0 0.0
        %603 = vmatprep.subr.mxu0 0.0
        %604 = vmatpush2.msra.mxu0 0.0
        %605 = vmatprep.subr.mxu0 0.0
        %606 = vmatpush2.msra.mxu0 0.0
        %607 = vmatprep.subr.mxu0 0.0
        %608 = vmatpush2.msra.mxu0 0.0
        %609 = vmatprep.subr.mxu0 0.0
        %610 = vmatpush2.msra.mxu0 0.0
        %611 = vmatprep.subr.mxu0 0.0
        %612 = vmatpush2.msra.mxu0 0.0
        %613 = vmatprep.subr.mxu0 0.0
        %614 = vmatpush2.msra.mxu0 0.0
        %615 = vmatprep.subr.mxu0 0.0
        %616 = vmatpush2.msra.mxu0 0.0
        %617 = vmatprep.subr.mxu0 0.0
        %618 = vmatpush2.msra.mxu0 0.0
        %619 = vmatprep.subr.mxu0 0.0
        %620 = vmatpush2.msra.mxu0 0.0
        %621 = vmatprep.mubr.f32.mxu0 0.0
        %622 = vmatmul.mubr.f32.gmra.mxu0 %v555
        %v623 = vpop.f32.mrf.mxu0
        %v624 = vadd.f32 0.0, %v623
        %v625 = vpop.f32.mrf.mxu0
        %626 = vdwg.mxu0
        %v628 = vsel %vm480, %v463, 0
        %630 = vmatprep.subr.mxu0 0.0
        %631 = vmatpush1.msra.mxu0 0.0
        %632 = vmatprep.subr.mxu0 0.0
        %633 = vmatpush1.msra.mxu0 0.0
        %634 = vmatprep.subr.mxu0 0.0
        %635 = vmatpush1.msra.mxu0 0.0
        %636 = vmatprep.subr.mxu0 0.0
        %637 = vmatpush1.msra.mxu0 0.0
        %638 = vmatprep.subr.mxu0 0.0
        %639 = vmatpush1.msra.mxu0 0.0
        %640 = vmatprep.subr.mxu0 0.0
        %641 = vmatpush1.msra.mxu0 0.0
        %642 = vmatprep.subr.mxu0 0.0
        %643 = vmatpush1.msra.mxu0 0.0
        %644 = vmatprep.subr.mxu0 0.0
        %645 = vmatpush1.msra.mxu0 0.0
        %646 = vmatprep.subr.mxu0 0.0
        %647 = vmatpush1.msra.mxu0 0.0
        %648 = vmatprep.subr.mxu0 0.0
        %649 = vmatpush1.msra.mxu0 0.0
        %650 = vmatprep.subr.mxu0 0.0
        %651 = vmatpush1.msra.mxu0 0.0
        %652 = vmatprep.subr.mxu0 0.0
        %653 = vmatpush1.msra.mxu0 0.0
        %654 = vmatprep.subr.mxu0 0.0
        %655 = vmatpush1.msra.mxu0 %v475
        %656 = vmatprep.subr.mxu0 0.0
        %657 = vmatpush1.msra.mxu0 %v474
        %658 = vmatprep.subr.mxu0 0.0
        %659 = vmatpush1.msra.mxu0 %v473
        %660 = vmatprep.subr.mxu0 0.0
        %661 = vmatpush1.msra.mxu0 %v472
        %662 = vmatprep.subr.mxu0 0.0
        %663 = vmatpush2.msra.mxu0 0.0
        %664 = vmatprep.subr.mxu0 0.0
        %665 = vmatpush2.msra.mxu0 0.0
        %666 = vmatprep.subr.mxu0 0.0
        %667 = vmatpush2.msra.mxu0 0.0
        %668 = vmatprep.subr.mxu0 0.0
        %669 = vmatpush2.msra.mxu0 0.0
        %670 = vmatprep.subr.mxu0 0.0
        %671 = vmatpush2.msra.mxu0 0.0
        %672 = vmatprep.subr.mxu0 0.0
        %673 = vmatpush2.msra.mxu0 0.0
        %674 = vmatprep.subr.mxu0 0.0
        %675 = vmatpush2.msra.mxu0 0.0
        %676 = vmatprep.subr.mxu0 0.0
        %677 = vmatpush2.msra.mxu0 0.0
        %678 = vmatprep.subr.mxu0 0.0
        %679 = vmatpush2.msra.mxu0 0.0
        %680 = vmatprep.subr.mxu0 0.0
        %681 = vmatpush2.msra.mxu0 0.0
        %682 = vmatprep.subr.mxu0 0.0
        %683 = vmatpush2.msra.mxu0 0.0
        %684 = vmatprep.subr.mxu0 0.0
        %685 = vmatpush2.msra.mxu0 0.0
        %686 = vmatprep.subr.mxu0 0.0
        %687 = vmatpush2.msra.mxu0 0.0
        %688 = vmatprep.subr.mxu0 0.0
        %689 = vmatpush2.msra.mxu0 0.0
        %690 = vmatprep.subr.mxu0 0.0
        %691 = vmatpush2.msra.mxu0 0.0
        %692 = vmatprep.subr.mxu0 0.0
        %693 = vmatpush2.msra.mxu0 0.0
        %694 = vmatprep.mubr.f32.mxu0 0.0
        %695 = vmatmul.mubr.f32.gmra.mxu0 %v628
        %v696 = vpop.f32.mrf.mxu0
        %v697 = vadd.f32 0.0, %v696
        %v698 = vpop.f32.mrf.mxu0
        %699 = vdwg.mxu0
        %vm700 = vcmask 64512
        %v702 = vsel %vm700, %v551, 0
        %v705 = vsel %vm700, %v624, 0
        %707 = vmatprep.subr.mxu0 0.0
        %708 = vmatpush1.xpose.msra.mxu0 0.0
        %709 = vmatprep.subr.mxu0 0.0
        %710 = vmatpush1.xpose.msra.mxu0 0.0
        %711 = vmatprep.subr.mxu0 0.0
        %712 = vmatpush1.xpose.msra.mxu0 0.0
        %713 = vmatprep.subr.mxu0 0.0
        %714 = vmatpush1.xpose.msra.mxu0 0.0
        %715 = vmatprep.subr.mxu0 0.0
        %716 = vmatpush1.xpose.msra.mxu0 0.0
        %717 = vmatprep.subr.mxu0 0.0
        %718 = vmatpush1.xpose.msra.mxu0 0.0
        %719 = vmatprep.subr.mxu0 0.0
        %720 = vmatpush1.xpose.msra.mxu0 0.0
        %721 = vmatprep.subr.mxu0 0.0
        %722 = vmatpush1.xpose.msra.mxu0 0.0
        %723 = vmatprep.subr.mxu0 0.0
        %724 = vmatpush1.xpose.msra.mxu0 0.0
        %725 = vmatprep.subr.mxu0 0.0
        %726 = vmatpush1.xpose.msra.mxu0 0.0
        %727 = vmatprep.subr.mxu0 0.0
        %728 = vmatpush1.xpose.msra.mxu0 0.0
        %729 = vmatprep.subr.mxu0 0.0
        %730 = vmatpush1.xpose.msra.mxu0 0.0
        %731 = vmatprep.subr.mxu0 0.0
        %732 = vmatpush1.xpose.msra.mxu0 0.0
        %733 = vmatprep.subr.mxu0 0.0
        %734 = vmatpush1.xpose.msra.mxu0 0.0
        %735 = vmatprep.subr.mxu0 0.0
        %736 = vmatpush1.xpose.msra.mxu0 0.0
        %737 = vmatprep.subr.mxu0 0.0
        %738 = vmatpush1.xpose.msra.mxu0 %v705
        %739 = vmatprep.subr.mxu0 0.0
        %740 = vmatpush2.xpose.msra.mxu0 0.0
        %741 = vmatprep.subr.mxu0 0.0
        %742 = vmatpush2.xpose.msra.mxu0 0.0
        %743 = vmatprep.subr.mxu0 0.0
        %744 = vmatpush2.xpose.msra.mxu0 0.0
        %745 = vmatprep.subr.mxu0 0.0
        %746 = vmatpush2.xpose.msra.mxu0 0.0
        %747 = vmatprep.subr.mxu0 0.0
        %748 = vmatpush2.xpose.msra.mxu0 0.0
        %749 = vmatprep.subr.mxu0 0.0
        %750 = vmatpush2.xpose.msra.mxu0 0.0
        %751 = vmatprep.subr.mxu0 0.0
        %752 = vmatpush2.xpose.msra.mxu0 0.0
        %753 = vmatprep.subr.mxu0 0.0
        %754 = vmatpush2.xpose.msra.mxu0 0.0
        %755 = vmatprep.subr.mxu0 0.0
        %756 = vmatpush2.xpose.msra.mxu0 0.0
        %757 = vmatprep.subr.mxu0 0.0
        %758 = vmatpush2.xpose.msra.mxu0 0.0
        %759 = vmatprep.subr.mxu0 0.0
        %760 = vmatpush2.xpose.msra.mxu0 0.0
        %761 = vmatprep.subr.mxu0 0.0
        %762 = vmatpush2.xpose.msra.mxu0 0.0
        %763 = vmatprep.subr.mxu0 0.0
        %764 = vmatpush2.xpose.msra.mxu0 0.0
        %765 = vmatprep.subr.mxu0 0.0
        %766 = vmatpush2.xpose.msra.mxu0 0.0
        %767 = vmatprep.subr.mxu0 0.0
        %768 = vmatpush2.xpose.msra.mxu0 0.0
        %769 = vmatprep.subr.mxu0 0.0
        %770 = vmatpush2.xpose.msra.mxu0 0.0
        %771 = vmatprep.mubr.f32.mxu0 0.0
        %772 = vmatmul.mubr.f32.gmra.mxu0 %v702
        %v773 = vpop.f32.mrf.mxu0
        %v774 = vadd.f32 0.0, %v773
        %v775 = vpop.f32.mrf.mxu0
        %776 = vdwg.mxu0
        %v777 = vmul.f32 %v774, 0.35355338
        %v778 = vsel %vm700, %v777, -inf
        %779 = vmax.xlane.f32.xlu0 %v778
        %v780 = vpop.xlane.xlu0 %779
        %v781 = vsub.f32 %v777, %v780
        %v782 = vmul.f32 %v781, 1.442695
        %v783 = vpow.pop %v782
        %v784 = vsel %vm700, %v783, 0.0
        %785 = vadd.xlane.f32.xlu0 %v784
        %v786 = vpop.xlane.xlu0 %785
        %v787 = vrcp.pop %v786
        %v788 = vmul.f32 1.0, %v787
        %v789 = vmul.f32 %v783, %v788
        %790 = vst.msk [vmem:[%s460] sm:$0xff] %vm700, %v789
        %v792 = vsel %vm700, %v789, 0
        %794 = vmatprep.subr.mxu0 0.0
        %795 = vmatpush1.msra.mxu0 0.0
        %796 = vmatprep.subr.mxu0 0.0
        %797 = vmatpush1.msra.mxu0 0.0
        %798 = vmatprep.subr.mxu0 0.0
        %799 = vmatpush1.msra.mxu0 0.0
        %800 = vmatprep.subr.mxu0 0.0
        %801 = vmatpush1.msra.mxu0 0.0
        %802 = vmatprep.subr.mxu0 0.0
        %803 = vmatpush1.msra.mxu0 0.0
        %804 = vmatprep.subr.mxu0 0.0
        %805 = vmatpush1.msra.mxu0 0.0
        %806 = vmatprep.subr.mxu0 0.0
        %807 = vmatpush1.msra.mxu0 0.0
        %808 = vmatprep.subr.mxu0 0.0
        %809 = vmatpush1.msra.mxu0 0.0
        %810 = vmatprep.subr.mxu0 0.0
        %811 = vmatpush1.msra.mxu0 0.0
        %812 = vmatprep.subr.mxu0 0.0
        %813 = vmatpush1.msra.mxu0 0.0
        %814 = vmatprep.subr.mxu0 0.0
        %815 = vmatpush1.msra.mxu0 0.0
        %816 = vmatprep.subr.mxu0 0.0
        %817 = vmatpush1.msra.mxu0 0.0
        %818 = vmatprep.subr.mxu0 0.0
        %819 = vmatpush1.msra.mxu0 0.0
        %820 = vmatprep.subr.mxu0 0.0
        %821 = vmatpush1.msra.mxu0 0.0
        %822 = vmatprep.subr.mxu0 0.0
        %823 = vmatpush1.msra.mxu0 0.0
        %824 = vmatprep.subr.mxu0 0.0
        %825 = vmatpush1.msra.mxu0 %v697
        %826 = vmatprep.subr.mxu0 0.0
        %827 = vmatpush2.msra.mxu0 0.0
        %828 = vmatprep.subr.mxu0 0.0
        %829 = vmatpush2.msra.mxu0 0.0
        %830 = vmatprep.subr.mxu0 0.0
        %831 = vmatpush2.msra.mxu0 0.0
        %832 = vmatprep.subr.mxu0 0.0
        %833 = vmatpush2.msra.mxu0 0.0
        %834 = vmatprep.subr.mxu0 0.0
        %835 = vmatpush2.msra.mxu0 0.0
        %836 = vmatprep.subr.mxu0 0.0
        %837 = vmatpush2.msra.mxu0 0.0
        %838 = vmatprep.subr.mxu0 0.0
        %839 = vmatpush2.msra.mxu0 0.0
        %840 = vmatprep.subr.mxu0 0.0
        %841 = vmatpush2.msra.mxu0 0.0
        %842 = vmatprep.subr.mxu0 0.0
        %843 = vmatpush2.msra.mxu0 0.0
        %844 = vmatprep.subr.mxu0 0.0
        %845 = vmatpush2.msra.mxu0 0.0
        %846 = vmatprep.subr.mxu0 0.0
        %847 = vmatpush2.msra.mxu0 0.0
        %848 = vmatprep.subr.mxu0 0.0
        %849 = vmatpush2.msra.mxu0 0.0
        %850 = vmatprep.subr.mxu0 0.0
        %851 = vmatpush2.msra.mxu0 0.0
        %852 = vmatprep.subr.mxu0 0.0
        %853 = vmatpush2.msra.mxu0 0.0
        %854 = vmatprep.subr.mxu0 0.0
        %855 = vmatpush2.msra.mxu0 0.0
        %856 = vmatprep.subr.mxu0 0.0
        %857 = vmatpush2.msra.mxu0 0.0
        %858 = vmatprep.mubr.f32.mxu0 0.0
        %859 = vmatmul.mubr.f32.gmra.mxu0 %v792
        %v860 = vpop.f32.mrf.mxu0
        %v861 = vadd.f32 0.0, %v860
        %v862 = vpop.f32.mrf.mxu0
        %863 = vdwg.mxu0
        %864 = vrot.lane.b32.xlu0 %v551, 120
        %v865 = vpop.permute.xlu0 %864
        %866 = vrot.lane.b32.xlu0 %v624, 120
        %v867 = vpop.permute.xlu0 %866
        %v868 = vsel %vm700, %v865, 0
        %v870 = vsel %vm700, %v867, 0
        %872 = vmatprep.subr.mxu0 0.0
        %873 = vmatpush1.xpose.msra.mxu0 0.0
        %874 = vmatprep.subr.mxu0 0.0
        %875 = vmatpush1.xpose.msra.mxu0 0.0
        %876 = vmatprep.subr.mxu0 0.0
        %877 = vmatpush1.xpose.msra.mxu0 0.0
        %878 = vmatprep.subr.mxu0 0.0
        %879 = vmatpush1.xpose.msra.mxu0 0.0
        %880 = vmatprep.subr.mxu0 0.0
        %881 = vmatpush1.xpose.msra.mxu0 0.0
        %882 = vmatprep.subr.mxu0 0.0
        %883 = vmatpush1.xpose.msra.mxu0 0.0
        %884 = vmatprep.subr.mxu0 0.0
        %885 = vmatpush1.xpose.msra.mxu0 0.0
        %886 = vmatprep.subr.mxu0 0.0
        %887 = vmatpush1.xpose.msra.mxu0 0.0
        %888 = vmatprep.subr.mxu0 0.0
        %889 = vmatpush1.xpose.msra.mxu0 0.0
        %890 = vmatprep.subr.mxu0 0.0
        %891 = vmatpush1.xpose.msra.mxu0 0.0
        %892 = vmatprep.subr.mxu0 0.0
        %893 = vmatpush1.xpose.msra.mxu0 0.0
        %894 = vmatprep.subr.mxu0 0.0
        %895 = vmatpush1.xpose.msra.mxu0 0.0
        %896 = vmatprep.subr.mxu0 0.0
        %897 = vmatpush1.xpose.msra.mxu0 0.0
        %898 = vmatprep.subr.mxu0 0.0
        %899 = vmatpush1.xpose.msra.mxu0 0.0
        %900 = vmatprep.subr.mxu0 0.0
        %901 = vmatpush1.xpose.msra.mxu0 0.0
        %902 = vmatprep.subr.mxu0 0.0
        %903 = vmatpush1.xpose.msra.mxu0 %v870
        %904 = vmatprep.subr.mxu0 0.0
        %905 = vmatpush2.xpose.msra.mxu0 0.0
        %906 = vmatprep.subr.mxu0 0.0
        %907 = vmatpush2.xpose.msra.mxu0 0.0
        %908 = vmatprep.subr.mxu0 0.0
        %909 = vmatpush2.xpose.msra.mxu0 0.0
        %910 = vmatprep.subr.mxu0 0.0
        %911 = vmatpush2.xpose.msra.mxu0 0.0
        %912 = vmatprep.subr.mxu0 0.0
        %913 = vmatpush2.xpose.msra.mxu0 0.0
        %914 = vmatprep.subr.mxu0 0.0
        %915 = vmatpush2.xpose.msra.mxu0 0.0
        %916 = vmatprep.subr.mxu0 0.0
        %917 = vmatpush2.xpose.msra.mxu0 0.0
        %918 = vmatprep.subr.mxu0 0.0
        %919 = vmatpush2.xpose.msra.mxu0 0.0
        %920 = vmatprep.subr.mxu0 0.0
        %921 = vmatpush2.xpose.msra.mxu0 0.0
        %922 = vmatprep.subr.mxu0 0.0
        %923 = vmatpush2.xpose.msra.mxu0 0.0
        %924 = vmatprep.subr.mxu0 0.0
        %925 = vmatpush2.xpose.msra.mxu0 0.0
        %926 = vmatprep.subr.mxu0 0.0
        %927 = vmatpush2.xpose.msra.mxu0 0.0
        %928 = vmatprep.subr.mxu0 0.0
        %929 = vmatpush2.xpose.msra.mxu0 0.0
        %930 = vmatprep.subr.mxu0 0.0
        %931 = vmatpush2.xpose.msra.mxu0 0.0
        %932 = vmatprep.subr.mxu0 0.0
        %933 = vmatpush2.xpose.msra.mxu0 0.0
        %934 = vmatprep.subr.mxu0 0.0
        %935 = vmatpush2.xpose.msra.mxu0 0.0
        %936 = vmatprep.mubr.f32.mxu0 0.0
        %937 = vmatmul.mubr.f32.gmra.mxu0 %v868
        %v938 = vpop.f32.mrf.mxu0
        %v939 = vadd.f32 0.0, %v938
        %v940 = vpop.f32.mrf.mxu0
        %941 = vdwg.mxu0
        %v942 = vmul.f32 %v939, 0.35355338
        %v943 = vsel %vm700, %v942, -inf
        %944 = vmax.xlane.f32.xlu0 %v943
        %v945 = vpop.xlane.xlu0 %944
        %v946 = vsub.f32 %v942, %v945
        %v947 = vmul.f32 %v946, 1.442695
        %v948 = vpow.pop %v947
        %v949 = vsel %vm700, %v948, 0.0
        %950 = vadd.xlane.f32.xlu0 %v949
        %v951 = vpop.xlane.xlu0 %950
        %v952 = vrcp.pop %v951
        %v953 = vmul.f32 1.0, %v952
        %v954 = vmul.f32 %v948, %v953
        %s955 = scalar_lea.vmem %s460, 8 [#allocation15]
        %956 = vst.msk [vmem:[%s955] sm:$0xff] %vm700, %v954
        %958 = vrot.lane.b32.xlu0 %v697, 120
        %v959 = vpop.permute.xlu0 %958
        %v962 = vsel %vm700, %v954, 0
        %964 = vmatprep.subr.mxu0 0.0
        %965 = vmatpush1.msra.mxu0 0.0
        %966 = vmatprep.subr.mxu0 0.0
        %967 = vmatpush1.msra.mxu0 0.0
        %968 = vmatprep.subr.mxu0 0.0
        %969 = vmatpush1.msra.mxu0 0.0
        %970 = vmatprep.subr.mxu0 0.0
        %971 = vmatpush1.msra.mxu0 0.0
        %972 = vmatprep.subr.mxu0 0.0
        %973 = vmatpush1.msra.mxu0 0.0
        %974 = vmatprep.subr.mxu0 0.0
        %975 = vmatpush1.msra.mxu0 0.0
        %976 = vmatprep.subr.mxu0 0.0
        %977 = vmatpush1.msra.mxu0 0.0
        %978 = vmatprep.subr.mxu0 0.0
        %979 = vmatpush1.msra.mxu0 0.0
        %980 = vmatprep.subr.mxu0 0.0
        %981 = vmatpush1.msra.mxu0 0.0
        %982 = vmatprep.subr.mxu0 0.0
        %983 = vmatpush1.msra.mxu0 0.0
        %984 = vmatprep.subr.mxu0 0.0
        %985 = vmatpush1.msra.mxu0 0.0
        %986 = vmatprep.subr.mxu0 0.0
        %987 = vmatpush1.msra.mxu0 0.0
        %988 = vmatprep.subr.mxu0 0.0
        %989 = vmatpush1.msra.mxu0 0.0
        %990 = vmatprep.subr.mxu0 0.0
        %991 = vmatpush1.msra.mxu0 0.0
        %992 = vmatprep.subr.mxu0 0.0
        %993 = vmatpush1.msra.mxu0 0.0
        %994 = vmatprep.subr.mxu0 0.0
        %995 = vmatpush1.msra.mxu0 %v959
        %996 = vmatprep.subr.mxu0 0.0
        %997 = vmatpush2.msra.mxu0 0.0
        %998 = vmatprep.subr.mxu0 0.0
        %999 = vmatpush2.msra.mxu0 0.0
        %1000 = vmatprep.subr.mxu0 0.0
        %1001 = vmatpush2.msra.mxu0 0.0
        %1002 = vmatprep.subr.mxu0 0.0
        %1003 = vmatpush2.msra.mxu0 0.0
        %1004 = vmatprep.subr.mxu0 0.0
        %1005 = vmatpush2.msra.mxu0 0.0
        %1006 = vmatprep.subr.mxu0 0.0
        %1007 = vmatpush2.msra.mxu0 0.0
        %1008 = vmatprep.subr.mxu0 0.0
        %1009 = vmatpush2.msra.mxu0 0.0
        %1010 = vmatprep.subr.mxu0 0.0
        %1011 = vmatpush2.msra.mxu0 0.0
        %1012 = vmatprep.subr.mxu0 0.0
        %1013 = vmatpush2.msra.mxu0 0.0
        %1014 = vmatprep.subr.mxu0 0.0
        %1015 = vmatpush2.msra.mxu0 0.0
        %1016 = vmatprep.subr.mxu0 0.0
        %1017 = vmatpush2.msra.mxu0 0.0
        %1018 = vmatprep.subr.mxu0 0.0
        %1019 = vmatpush2.msra.mxu0 0.0
        %1020 = vmatprep.subr.mxu0 0.0
        %1021 = vmatpush2.msra.mxu0 0.0
        %1022 = vmatprep.subr.mxu0 0.0
        %1023 = vmatpush2.msra.mxu0 0.0
        %1024 = vmatprep.subr.mxu0 0.0
        %1025 = vmatpush2.msra.mxu0 0.0
        %1026 = vmatprep.subr.mxu0 0.0
        %1027 = vmatpush2.msra.mxu0 0.0
        %1028 = vmatprep.mubr.f32.mxu0 0.0
        %1029 = vmatmul.mubr.f32.gmra.mxu0 %v962
        %v1030 = vpop.f32.mrf.mxu0
        %v1031 = vadd.f32 0.0, %v1030
        %v1032 = vpop.f32.mrf.mxu0
        %1033 = vdwg.mxu0
        %v1035 = vsel %vm700, %v1031, 0
        %1037 = vmatprep.subr.mxu0 0.0
        %1038 = vmatpush1.msra.mxu0 0.0
        %1039 = vmatprep.subr.mxu0 0.0
        %1040 = vmatpush1.msra.mxu0 0.0
        %1041 = vmatprep.subr.mxu0 0.0
        %1042 = vmatpush1.msra.mxu0 0.0
        %1043 = vmatprep.subr.mxu0 0.0
        %1044 = vmatpush1.msra.mxu0 0.0
        %1045 = vmatprep.subr.mxu0 0.0
        %1046 = vmatpush1.msra.mxu0 0.0
        %1047 = vmatprep.subr.mxu0 0.0
        %1048 = vmatpush1.msra.mxu0 0.0
        %1049 = vmatprep.subr.mxu0 0.0
        %1050 = vmatpush1.msra.mxu0 0.0
        %1051 = vmatprep.subr.mxu0 0.0
        %1052 = vmatpush1.msra.mxu0 0.0
        %1053 = vmatprep.subr.mxu0 0.0
        %1054 = vmatpush1.msra.mxu0 0.0
        %1055 = vmatprep.subr.mxu0 0.0
        %1056 = vmatpush1.msra.mxu0 0.0
        %1057 = vmatprep.subr.mxu0 0.0
        %1058 = vmatpush1.msra.mxu0 0.0
        %1059 = vmatprep.subr.mxu0 0.0
        %1060 = vmatpush1.msra.mxu0 0.0
        %1061 = vmatprep.subr.mxu0 0.0
        %1062 = vmatpush1.msra.mxu0 0.0
        %1063 = vmatprep.subr.mxu0 0.0
        %1064 = vmatpush1.msra.mxu0 0.0
        %1065 = vmatprep.subr.mxu0 0.0
        %1066 = vmatpush1.msra.mxu0 0.0
        %1067 = vmatprep.subr.mxu0 0.0
        %1068 = vmatpush1.msra.mxu0 %v477
        %1069 = vmatprep.subr.mxu0 0.0
        %1070 = vmatpush2.msra.mxu0 0.0
        %1071 = vmatprep.subr.mxu0 0.0
        %1072 = vmatpush2.msra.mxu0 0.0
        %1073 = vmatprep.subr.mxu0 0.0
        %1074 = vmatpush2.msra.mxu0 0.0
        %1075 = vmatprep.subr.mxu0 0.0
        %1076 = vmatpush2.msra.mxu0 0.0
        %1077 = vmatprep.subr.mxu0 0.0
        %1078 = vmatpush2.msra.mxu0 0.0
        %1079 = vmatprep.subr.mxu0 0.0
        %1080 = vmatpush2.msra.mxu0 0.0
        %1081 = vmatprep.subr.mxu0 0.0
        %1082 = vmatpush2.msra.mxu0 0.0
        %1083 = vmatprep.subr.mxu0 0.0
        %1084 = vmatpush2.msra.mxu0 0.0
        %1085 = vmatprep.subr.mxu0 0.0
        %1086 = vmatpush2.msra.mxu0 0.0
        %1087 = vmatprep.subr.mxu0 0.0
        %1088 = vmatpush2.msra.mxu0 0.0
        %1089 = vmatprep.subr.mxu0 0.0
        %1090 = vmatpush2.msra.mxu0 0.0
        %1091 = vmatprep.subr.mxu0 0.0
        %1092 = vmatpush2.msra.mxu0 0.0
        %1093 = vmatprep.subr.mxu0 0.0
        %1094 = vmatpush2.msra.mxu0 0.0
        %1095 = vmatprep.subr.mxu0 0.0
        %1096 = vmatpush2.msra.mxu0 0.0
        %1097 = vmatprep.subr.mxu0 0.0
        %1098 = vmatpush2.msra.mxu0 0.0
        %1099 = vmatprep.subr.mxu0 0.0
        %1100 = vmatpush2.msra.mxu0 0.0
        %1101 = vmatprep.mubr.f32.mxu0 0.0
        %1102 = vmatmul.mubr.f32.gmra.mxu0 %v1035
        %v1103 = vpop.f32.mrf.mxu0
        %v1104 = vadd.f32 0.0, %v1103
        %v1105 = vpop.f32.mrf.mxu0
        %1106 = vdwg.mxu0
        %v1108 = vsel %vm700, %v861, 0
        %1110 = vmatprep.subr.mxu0 0.0
        %1111 = vmatpush1.msra.mxu0 0.0
        %1112 = vmatprep.subr.mxu0 0.0
        %1113 = vmatpush1.msra.mxu0 0.0
        %1114 = vmatprep.subr.mxu0 0.0
        %1115 = vmatpush1.msra.mxu0 0.0
        %1116 = vmatprep.subr.mxu0 0.0
        %1117 = vmatpush1.msra.mxu0 0.0
        %1118 = vmatprep.subr.mxu0 0.0
        %1119 = vmatpush1.msra.mxu0 0.0
        %1120 = vmatprep.subr.mxu0 0.0
        %1121 = vmatpush1.msra.mxu0 0.0
        %1122 = vmatprep.subr.mxu0 0.0
        %1123 = vmatpush1.msra.mxu0 0.0
        %1124 = vmatprep.subr.mxu0 0.0
        %1125 = vmatpush1.msra.mxu0 0.0
        %1126 = vmatprep.subr.mxu0 0.0
        %1127 = vmatpush1.msra.mxu0 0.0
        %1128 = vmatprep.subr.mxu0 0.0
        %1129 = vmatpush1.msra.mxu0 0.0
        %1130 = vmatprep.subr.mxu0 0.0
        %1131 = vmatpush1.msra.mxu0 0.0
        %1132 = vmatprep.subr.mxu0 0.0
        %1133 = vmatpush1.msra.mxu0 0.0
        %1134 = vmatprep.subr.mxu0 0.0
        %1135 = vmatpush1.msra.mxu0 0.0
        %1136 = vmatprep.subr.mxu0 0.0
        %1137 = vmatpush1.msra.mxu0 0.0
        %1138 = vmatprep.subr.mxu0 0.0
        %1139 = vmatpush1.msra.mxu0 0.0
        %1140 = vmatprep.subr.mxu0 0.0
        %1141 = vmatpush1.msra.mxu0 %v476
        %1142 = vmatprep.subr.mxu0 0.0
        %1143 = vmatpush2.msra.mxu0 0.0
        %1144 = vmatprep.subr.mxu0 0.0
        %1145 = vmatpush2.msra.mxu0 0.0
        %1146 = vmatprep.subr.mxu0 0.0
        %1147 = vmatpush2.msra.mxu0 0.0
        %1148 = vmatprep.subr.mxu0 0.0
        %1149 = vmatpush2.msra.mxu0 0.0
        %1150 = vmatprep.subr.mxu0 0.0
        %1151 = vmatpush2.msra.mxu0 0.0
        %1152 = vmatprep.subr.mxu0 0.0
        %1153 = vmatpush2.msra.mxu0 0.0
        %1154 = vmatprep.subr.mxu0 0.0
        %1155 = vmatpush2.msra.mxu0 0.0
        %1156 = vmatprep.subr.mxu0 0.0
        %1157 = vmatpush2.msra.mxu0 0.0
        %1158 = vmatprep.subr.mxu0 0.0
        %1159 = vmatpush2.msra.mxu0 0.0
        %1160 = vmatprep.subr.mxu0 0.0
        %1161 = vmatpush2.msra.mxu0 0.0
        %1162 = vmatprep.subr.mxu0 0.0
        %1163 = vmatpush2.msra.mxu0 0.0
        %1164 = vmatprep.subr.mxu0 0.0
        %1165 = vmatpush2.msra.mxu0 0.0
        %1166 = vmatprep.subr.mxu0 0.0
        %1167 = vmatpush2.msra.mxu0 0.0
        %1168 = vmatprep.subr.mxu0 0.0
        %1169 = vmatpush2.msra.mxu0 0.0
        %1170 = vmatprep.subr.mxu0 0.0
        %1171 = vmatpush2.msra.mxu0 0.0
        %1172 = vmatprep.subr.mxu0 0.0
        %1173 = vmatpush2.msra.mxu0 0.0
        %1174 = vmatprep.mubr.f32.mxu0 0.0
        %1175 = vmatmul.mubr.f32.gmra.mxu0 %v1108
        %v1176 = vpop.f32.mrf.mxu0
        %v1177 = vadd.f32 %v1104, %v1176
        %v1178 = vpop.f32.mrf.mxu0
        %1179 = vdwg.mxu0
        %1180 = vrot.lane.b32.xlu0 %v551, 112
        %v1181 = vpop.permute.xlu0 %1180
        %1182 = vrot.lane.b32.xlu0 %v624, 112
        %v1183 = vpop.permute.xlu0 %1182
        %v1184 = vsel %vm700, %v1181, 0
        %v1186 = vsel %vm700, %v1183, 0
        %1188 = vmatprep.subr.mxu0 0.0
        %1189 = vmatpush1.xpose.msra.mxu0 0.0
        %1190 = vmatprep.subr.mxu0 0.0
        %1191 = vmatpush1.xpose.msra.mxu0 0.0
        %1192 = vmatprep.subr.mxu0 0.0
        %1193 = vmatpush1.xpose.msra.mxu0 0.0
        %1194 = vmatprep.subr.mxu0 0.0
        %1195 = vmatpush1.xpose.msra.mxu0 0.0
        %1196 = vmatprep.subr.mxu0 0.0
        %1197 = vmatpush1.xpose.msra.mxu0 0.0
        %1198 = vmatprep.subr.mxu0 0.0
        %1199 = vmatpush1.xpose.msra.mxu0 0.0
        %1200 = vmatprep.subr.mxu0 0.0
        %1201 = vmatpush1.xpose.msra.mxu0 0.0
        %1202 = vmatprep.subr.mxu0 0.0
        %1203 = vmatpush1.xpose.msra.mxu0 0.0
        %1204 = vmatprep.subr.mxu0 0.0
        %1205 = vmatpush1.xpose.msra.mxu0 0.0
        %1206 = vmatprep.subr.mxu0 0.0
        %1207 = vmatpush1.xpose.msra.mxu0 0.0
        %1208 = vmatprep.subr.mxu0 0.0
        %1209 = vmatpush1.xpose.msra.mxu0 0.0
        %1210 = vmatprep.subr.mxu0 0.0
        %1211 = vmatpush1.xpose.msra.mxu0 0.0
        %1212 = vmatprep.subr.mxu0 0.0
        %1213 = vmatpush1.xpose.msra.mxu0 0.0
        %1214 = vmatprep.subr.mxu0 0.0
        %1215 = vmatpush1.xpose.msra.mxu0 0.0
        %1216 = vmatprep.subr.mxu0 0.0
        %1217 = vmatpush1.xpose.msra.mxu0 0.0
        %1218 = vmatprep.subr.mxu0 0.0
        %1219 = vmatpush1.xpose.msra.mxu0 %v1186
        %1220 = vmatprep.subr.mxu0 0.0
        %1221 = vmatpush2.xpose.msra.mxu0 0.0
        %1222 = vmatprep.subr.mxu0 0.0
        %1223 = vmatpush2.xpose.msra.mxu0 0.0
        %1224 = vmatprep.subr.mxu0 0.0
        %1225 = vmatpush2.xpose.msra.mxu0 0.0
        %1226 = vmatprep.subr.mxu0 0.0
        %1227 = vmatpush2.xpose.msra.mxu0 0.0
        %1228 = vmatprep.subr.mxu0 0.0
        %1229 = vmatpush2.xpose.msra.mxu0 0.0
        %1230 = vmatprep.subr.mxu0 0.0
        %1231 = vmatpush2.xpose.msra.mxu0 0.0
        %1232 = vmatprep.subr.mxu0 0.0
        %1233 = vmatpush2.xpose.msra.mxu0 0.0
        %1234 = vmatprep.subr.mxu0 0.0
        %1235 = vmatpush2.xpose.msra.mxu0 0.0
        %1236 = vmatprep.subr.mxu0 0.0
        %1237 = vmatpush2.xpose.msra.mxu0 0.0
        %1238 = vmatprep.subr.mxu0 0.0
        %1239 = vmatpush2.xpose.msra.mxu0 0.0
        %1240 = vmatprep.subr.mxu0 0.0
        %1241 = vmatpush2.xpose.msra.mxu0 0.0
        %1242 = vmatprep.subr.mxu0 0.0
        %1243 = vmatpush2.xpose.msra.mxu0 0.0
        %1244 = vmatprep.subr.mxu0 0.0
        %1245 = vmatpush2.xpose.msra.mxu0 0.0
        %1246 = vmatprep.subr.mxu0 0.0
        %1247 = vmatpush2.xpose.msra.mxu0 0.0
        %1248 = vmatprep.subr.mxu0 0.0
        %1249 = vmatpush2.xpose.msra.mxu0 0.0
        %1250 = vmatprep.subr.mxu0 0.0
        %1251 = vmatpush2.xpose.msra.mxu0 0.0
        %1252 = vmatprep.mubr.f32.mxu0 0.0
        %1253 = vmatmul.mubr.f32.gmra.mxu0 %v1184
        %v1254 = vpop.f32.mrf.mxu0
        %v1255 = vadd.f32 0.0, %v1254
        %v1256 = vpop.f32.mrf.mxu0
        %1257 = vdwg.mxu0
        %v1258 = vmul.f32 %v1255, 0.35355338
        %v1259 = vsel %vm700, %v1258, -inf
        %1260 = vmax.xlane.f32.xlu0 %v1259
        %v1261 = vpop.xlane.xlu0 %1260
        %v1262 = vsub.f32 %v1258, %v1261
        %v1263 = vmul.f32 %v1262, 1.442695
        %v1264 = vpow.pop %v1263
        %v1265 = vsel %vm700, %v1264, 0.0
        %1266 = vadd.xlane.f32.xlu0 %v1265
        %v1267 = vpop.xlane.xlu0 %1266
        %v1268 = vrcp.pop %v1267
        %v1269 = vmul.f32 1.0, %v1268
        %v1270 = vmul.f32 %v1264, %v1269
        %s1271 = scalar_lea.vmem %s460, 16 [#allocation15]
        %1272 = vst.msk [vmem:[%s1271] sm:$0xff] %vm700, %v1270
        %1273 = vrot.lane.b32.xlu0 %v697, 112
        %v1274 = vpop.permute.xlu0 %1273
        %v1277 = vsel %vm700, %v1270, 0
        %1279 = vmatprep.subr.mxu0 0.0
        %1280 = vmatpush1.msra.mxu0 0.0
        %1281 = vmatprep.subr.mxu0 0.0
        %1282 = vmatpush1.msra.mxu0 0.0
        %1283 = vmatprep.subr.mxu0 0.0
        %1284 = vmatpush1.msra.mxu0 0.0
        %1285 = vmatprep.subr.mxu0 0.0
        %1286 = vmatpush1.msra.mxu0 0.0
        %1287 = vmatprep.subr.mxu0 0.0
        %1288 = vmatpush1.msra.mxu0 0.0
        %1289 = vmatprep.subr.mxu0 0.0
        %1290 = vmatpush1.msra.mxu0 0.0
        %1291 = vmatprep.subr.mxu0 0.0
        %1292 = vmatpush1.msra.mxu0 0.0
        %1293 = vmatprep.subr.mxu0 0.0
        %1294 = vmatpush1.msra.mxu0 0.0
        %1295 = vmatprep.subr.mxu0 0.0
        %1296 = vmatpush1.msra.mxu0 0.0
        %1297 = vmatprep.subr.mxu0 0.0
        %1298 = vmatpush1.msra.mxu0 0.0
        %1299 = vmatprep.subr.mxu0 0.0
        %1300 = vmatpush1.msra.mxu0 0.0
        %1301 = vmatprep.subr.mxu0 0.0
        %1302 = vmatpush1.msra.mxu0 0.0
        %1303 = vmatprep.subr.mxu0 0.0
        %1304 = vmatpush1.msra.mxu0 0.0
        %1305 = vmatprep.subr.mxu0 0.0
        %1306 = vmatpush1.msra.mxu0 0.0
        %1307 = vmatprep.subr.mxu0 0.0
        %1308 = vmatpush1.msra.mxu0 0.0
        %1309 = vmatprep.subr.mxu0 0.0
        %1310 = vmatpush1.msra.mxu0 %v1274
        %1311 = vmatprep.subr.mxu0 0.0
        %1312 = vmatpush2.msra.mxu0 0.0
        %1313 = vmatprep.subr.mxu0 0.0
        %1314 = vmatpush2.msra.mxu0 0.0
        %1315 = vmatprep.subr.mxu0 0.0
        %1316 = vmatpush2.msra.mxu0 0.0
        %1317 = vmatprep.subr.mxu0 0.0
        %1318 = vmatpush2.msra.mxu0 0.0
        %1319 = vmatprep.subr.mxu0 0.0
        %1320 = vmatpush2.msra.mxu0 0.0
        %1321 = vmatprep.subr.mxu0 0.0
        %1322 = vmatpush2.msra.mxu0 0.0
        %1323 = vmatprep.subr.mxu0 0.0
        %1324 = vmatpush2.msra.mxu0 0.0
        %1325 = vmatprep.subr.mxu0 0.0
        %1326 = vmatpush2.msra.mxu0 0.0
        %1327 = vmatprep.subr.mxu0 0.0
        %1328 = vmatpush2.msra.mxu0 0.0
        %1329 = vmatprep.subr.mxu0 0.0
        %1330 = vmatpush2.msra.mxu0 0.0
        %1331 = vmatprep.subr.mxu0 0.0
        %1332 = vmatpush2.msra.mxu0 0.0
        %1333 = vmatprep.subr.mxu0 0.0
        %1334 = vmatpush2.msra.mxu0 0.0
        %1335 = vmatprep.subr.mxu0 0.0
        %1336 = vmatpush2.msra.mxu0 0.0
        %1337 = vmatprep.subr.mxu0 0.0
        %1338 = vmatpush2.msra.mxu0 0.0
        %1339 = vmatprep.subr.mxu0 0.0
        %1340 = vmatpush2.msra.mxu0 0.0
        %1341 = vmatprep.subr.mxu0 0.0
        %1342 = vmatpush2.msra.mxu0 0.0
        %1343 = vmatprep.mubr.f32.mxu0 0.0
        %1344 = vmatmul.mubr.f32.gmra.mxu0 %v1277
        %v1345 = vpop.f32.mrf.mxu0
        %v1346 = vadd.f32 0.0, %v1345
        %v1347 = vpop.f32.mrf.mxu0
        %1348 = vdwg.mxu0
        %v1350 = vsel %vm700, %v1346, 0
        %1352 = vmatprep.subr.mxu0 0.0
        %1353 = vmatpush1.msra.mxu0 0.0
        %1354 = vmatprep.subr.mxu0 0.0
        %1355 = vmatpush1.msra.mxu0 0.0
        %1356 = vmatprep.subr.mxu0 0.0
        %1357 = vmatpush1.msra.mxu0 0.0
        %1358 = vmatprep.subr.mxu0 0.0
        %1359 = vmatpush1.msra.mxu0 0.0
        %1360 = vmatprep.subr.mxu0 0.0
        %1361 = vmatpush1.msra.mxu0 0.0
        %1362 = vmatprep.subr.mxu0 0.0
        %1363 = vmatpush1.msra.mxu0 0.0
        %1364 = vmatprep.subr.mxu0 0.0
        %1365 = vmatpush1.msra.mxu0 0.0
        %1366 = vmatprep.subr.mxu0 0.0
        %1367 = vmatpush1.msra.mxu0 0.0
        %1368 = vmatprep.subr.mxu0 0.0
        %1369 = vmatpush1.msra.mxu0 0.0
        %1370 = vmatprep.subr.mxu0 0.0
        %1371 = vmatpush1.msra.mxu0 0.0
        %1372 = vmatprep.subr.mxu0 0.0
        %1373 = vmatpush1.msra.mxu0 0.0
        %1374 = vmatprep.subr.mxu0 0.0
        %1375 = vmatpush1.msra.mxu0 0.0
        %1376 = vmatprep.subr.mxu0 0.0
        %1377 = vmatpush1.msra.mxu0 0.0
        %1378 = vmatprep.subr.mxu0 0.0
        %1379 = vmatpush1.msra.mxu0 0.0
        %1380 = vmatprep.subr.mxu0 0.0
        %1381 = vmatpush1.msra.mxu0 0.0
        %1382 = vmatprep.subr.mxu0 0.0
        %1383 = vmatpush1.msra.mxu0 %v478
        %1384 = vmatprep.subr.mxu0 0.0
        %1385 = vmatpush2.msra.mxu0 0.0
        %1386 = vmatprep.subr.mxu0 0.0
        %1387 = vmatpush2.msra.mxu0 0.0
        %1388 = vmatprep.subr.mxu0 0.0
        %1389 = vmatpush2.msra.mxu0 0.0
        %1390 = vmatprep.subr.mxu0 0.0
        %1391 = vmatpush2.msra.mxu0 0.0
        %1392 = vmatprep.subr.mxu0 0.0
        %1393 = vmatpush2.msra.mxu0 0.0
        %1394 = vmatprep.subr.mxu0 0.0
        %1395 = vmatpush2.msra.mxu0 0.0
        %1396 = vmatprep.subr.mxu0 0.0
        %1397 = vmatpush2.msra.mxu0 0.0
        %1398 = vmatprep.subr.mxu0 0.0
        %1399 = vmatpush2.msra.mxu0 0.0
        %1400 = vmatprep.subr.mxu0 0.0
        %1401 = vmatpush2.msra.mxu0 0.0
        %1402 = vmatprep.subr.mxu0 0.0
        %1403 = vmatpush2.msra.mxu0 0.0
        %1404 = vmatprep.subr.mxu0 0.0
        %1405 = vmatpush2.msra.mxu0 0.0
        %1406 = vmatprep.subr.mxu0 0.0
        %1407 = vmatpush2.msra.mxu0 0.0
        %1408 = vmatprep.subr.mxu0 0.0
        %1409 = vmatpush2.msra.mxu0 0.0
        %1410 = vmatprep.subr.mxu0 0.0
        %1411 = vmatpush2.msra.mxu0 0.0
        %1412 = vmatprep.subr.mxu0 0.0
        %1413 = vmatpush2.msra.mxu0 0.0
        %1414 = vmatprep.subr.mxu0 0.0
        %1415 = vmatpush2.msra.mxu0 0.0
        %1416 = vmatprep.mubr.f32.mxu0 0.0
        %1417 = vmatmul.mubr.f32.gmra.mxu0 %v1350
        %v1418 = vpop.f32.mrf.mxu0
        %v1419 = vadd.f32 0.0, %v1418
        %v1420 = vpop.f32.mrf.mxu0
        %1421 = vdwg.mxu0
        %v1422 = vadd.f32 %v1177, %v1419
        %1423 = vrot.lane.b32.xlu0 %v551, 104
        %v1424 = vpop.permute.xlu0 %1423
        %1425 = vrot.lane.b32.xlu0 %v624, 104
        %v1426 = vpop.permute.xlu0 %1425
        %v1427 = vsel %vm700, %v1424, 0
        %v1429 = vsel %vm700, %v1426, 0
        %1431 = vmatprep.subr.mxu0 0.0
        %1432 = vmatpush1.xpose.msra.mxu0 0.0
        %1433 = vmatprep.subr.mxu0 0.0
        %1434 = vmatpush1.xpose.msra.mxu0 0.0
        %1435 = vmatprep.subr.mxu0 0.0
        %1436 = vmatpush1.xpose.msra.mxu0 0.0
        %1437 = vmatprep.subr.mxu0 0.0
        %1438 = vmatpush1.xpose.msra.mxu0 0.0
        %1439 = vmatprep.subr.mxu0 0.0
        %1440 = vmatpush1.xpose.msra.mxu0 0.0
        %1441 = vmatprep.subr.mxu0 0.0
        %1442 = vmatpush1.xpose.msra.mxu0 0.0
        %1443 = vmatprep.subr.mxu0 0.0
        %1444 = vmatpush1.xpose.msra.mxu0 0.0
        %1445 = vmatprep.subr.mxu0 0.0
        %1446 = vmatpush1.xpose.msra.mxu0 0.0
        %1447 = vmatprep.subr.mxu0 0.0
        %1448 = vmatpush1.xpose.msra.mxu0 0.0
        %1449 = vmatprep.subr.mxu0 0.0
        %1450 = vmatpush1.xpose.msra.mxu0 0.0
        %1451 = vmatprep.subr.mxu0 0.0
        %1452 = vmatpush1.xpose.msra.mxu0 0.0
        %1453 = vmatprep.subr.mxu0 0.0
        %1454 = vmatpush1.xpose.msra.mxu0 0.0
        %1455 = vmatprep.subr.mxu0 0.0
        %1456 = vmatpush1.xpose.msra.mxu0 0.0
        %1457 = vmatprep.subr.mxu0 0.0
        %1458 = vmatpush1.xpose.msra.mxu0 0.0
        %1459 = vmatprep.subr.mxu0 0.0
        %1460 = vmatpush1.xpose.msra.mxu0 0.0
        %1461 = vmatprep.subr.mxu0 0.0
        %1462 = vmatpush1.xpose.msra.mxu0 %v1429
        %1463 = vmatprep.subr.mxu0 0.0
        %1464 = vmatpush2.xpose.msra.mxu0 0.0
        %1465 = vmatprep.subr.mxu0 0.0
        %1466 = vmatpush2.xpose.msra.mxu0 0.0
        %1467 = vmatprep.subr.mxu0 0.0
        %1468 = vmatpush2.xpose.msra.mxu0 0.0
        %1469 = vmatprep.subr.mxu0 0.0
        %1470 = vmatpush2.xpose.msra.mxu0 0.0
        %1471 = vmatprep.subr.mxu0 0.0
        %1472 = vmatpush2.xpose.msra.mxu0 0.0
        %1473 = vmatprep.subr.mxu0 0.0
        %1474 = vmatpush2.xpose.msra.mxu0 0.0
        %1475 = vmatprep.subr.mxu0 0.0
        %1476 = vmatpush2.xpose.msra.mxu0 0.0
        %1477 = vmatprep.subr.mxu0 0.0
        %1478 = vmatpush2.xpose.msra.mxu0 0.0
        %1479 = vmatprep.subr.mxu0 0.0
        %1480 = vmatpush2.xpose.msra.mxu0 0.0
        %1481 = vmatprep.subr.mxu0 0.0
        %1482 = vmatpush2.xpose.msra.mxu0 0.0
        %1483 = vmatprep.subr.mxu0 0.0
        %1484 = vmatpush2.xpose.msra.mxu0 0.0
        %1485 = vmatprep.subr.mxu0 0.0
        %1486 = vmatpush2.xpose.msra.mxu0 0.0
        %1487 = vmatprep.subr.mxu0 0.0
        %1488 = vmatpush2.xpose.msra.mxu0 0.0
        %1489 = vmatprep.subr.mxu0 0.0
        %1490 = vmatpush2.xpose.msra.mxu0 0.0
        %1491 = vmatprep.subr.mxu0 0.0
        %1492 = vmatpush2.xpose.msra.mxu0 0.0
        %1493 = vmatprep.subr.mxu0 0.0
        %1494 = vmatpush2.xpose.msra.mxu0 0.0
        %1495 = vmatprep.mubr.f32.mxu0 0.0
        %1496 = vmatmul.mubr.f32.gmra.mxu0 %v1427
        %v1497 = vpop.f32.mrf.mxu0
        %v1498 = vadd.f32 0.0, %v1497
        %v1499 = vpop.f32.mrf.mxu0
        %1500 = vdwg.mxu0
        %v1501 = vmul.f32 %v1498, 0.35355338
        %v1502 = vsel %vm700, %v1501, -inf
        %1503 = vmax.xlane.f32.xlu0 %v1502
        %v1504 = vpop.xlane.xlu0 %1503
        %v1505 = vsub.f32 %v1501, %v1504
        %v1506 = vmul.f32 %v1505, 1.442695
        %v1507 = vpow.pop %v1506
        %v1508 = vsel %vm700, %v1507, 0.0
        %1509 = vadd.xlane.f32.xlu0 %v1508
        %v1510 = vpop.xlane.xlu0 %1509
        %v1511 = vrcp.pop %v1510
        %v1512 = vmul.f32 1.0, %v1511
        %v1513 = vmul.f32 %v1507, %v1512
        %s1514 = scalar_lea.vmem %s460, 24 [#allocation15]
        %1515 = vst.msk [vmem:[%s1514] sm:$0xff] %vm700, %v1513
        %1516 = vrot.lane.b32.xlu0 %v697, 104
        %v1517 = vpop.permute.xlu0 %1516
        %v1520 = vsel %vm700, %v1513, 0
        %1522 = vmatprep.subr.mxu0 0.0
        %1523 = vmatpush1.msra.mxu0 0.0
        %1524 = vmatprep.subr.mxu0 0.0
        %1525 = vmatpush1.msra.mxu0 0.0
        %1526 = vmatprep.subr.mxu0 0.0
        %1527 = vmatpush1.msra.mxu0 0.0
        %1528 = vmatprep.subr.mxu0 0.0
        %1529 = vmatpush1.msra.mxu0 0.0
        %1530 = vmatprep.subr.mxu0 0.0
        %1531 = vmatpush1.msra.mxu0 0.0
        %1532 = vmatprep.subr.mxu0 0.0
        %1533 = vmatpush1.msra.mxu0 0.0
        %1534 = vmatprep.subr.mxu0 0.0
        %1535 = vmatpush1.msra.mxu0 0.0
        %1536 = vmatprep.subr.mxu0 0.0
        %1537 = vmatpush1.msra.mxu0 0.0
        %1538 = vmatprep.subr.mxu0 0.0
        %1539 = vmatpush1.msra.mxu0 0.0
        %1540 = vmatprep.subr.mxu0 0.0
        %1541 = vmatpush1.msra.mxu0 0.0
        %1542 = vmatprep.subr.mxu0 0.0
        %1543 = vmatpush1.msra.mxu0 0.0
        %1544 = vmatprep.subr.mxu0 0.0
        %1545 = vmatpush1.msra.mxu0 0.0
        %1546 = vmatprep.subr.mxu0 0.0
        %1547 = vmatpush1.msra.mxu0 0.0
        %1548 = vmatprep.subr.mxu0 0.0
        %1549 = vmatpush1.msra.mxu0 0.0
        %1550 = vmatprep.subr.mxu0 0.0
        %1551 = vmatpush1.msra.mxu0 0.0
        %1552 = vmatprep.subr.mxu0 0.0
        %1553 = vmatpush1.msra.mxu0 %v1517
        %1554 = vmatprep.subr.mxu0 0.0
        %1555 = vmatpush2.msra.mxu0 0.0
        %1556 = vmatprep.subr.mxu0 0.0
        %1557 = vmatpush2.msra.mxu0 0.0
        %1558 = vmatprep.subr.mxu0 0.0
        %1559 = vmatpush2.msra.mxu0 0.0
        %1560 = vmatprep.subr.mxu0 0.0
        %1561 = vmatpush2.msra.mxu0 0.0
        %1562 = vmatprep.subr.mxu0 0.0
        %1563 = vmatpush2.msra.mxu0 0.0
        %1564 = vmatprep.subr.mxu0 0.0
        %1565 = vmatpush2.msra.mxu0 0.0
        %1566 = vmatprep.subr.mxu0 0.0
        %1567 = vmatpush2.msra.mxu0 0.0
        %1568 = vmatprep.subr.mxu0 0.0
        %1569 = vmatpush2.msra.mxu0 0.0
        %1570 = vmatprep.subr.mxu0 0.0
        %1571 = vmatpush2.msra.mxu0 0.0
        %1572 = vmatprep.subr.mxu0 0.0
        %1573 = vmatpush2.msra.mxu0 0.0
        %1574 = vmatprep.subr.mxu0 0.0
        %1575 = vmatpush2.msra.mxu0 0.0
        %1576 = vmatprep.subr.mxu0 0.0
        %1577 = vmatpush2.msra.mxu0 0.0
        %1578 = vmatprep.subr.mxu0 0.0
        %1579 = vmatpush2.msra.mxu0 0.0
        %1580 = vmatprep.subr.mxu0 0.0
        %1581 = vmatpush2.msra.mxu0 0.0
        %1582 = vmatprep.subr.mxu0 0.0
        %1583 = vmatpush2.msra.mxu0 0.0
        %1584 = vmatprep.subr.mxu0 0.0
        %1585 = vmatpush2.msra.mxu0 0.0
        %1586 = vmatprep.mubr.f32.mxu0 0.0
        %1587 = vmatmul.mubr.f32.gmra.mxu0 %v1520
        %v1588 = vpop.f32.mrf.mxu0
        %v1589 = vadd.f32 0.0, %v1588
        %v1590 = vpop.f32.mrf.mxu0
        %1591 = vdwg.mxu0
        %v1593 = vsel %vm700, %v1589, 0
        %1595 = vmatprep.subr.mxu0 0.0
        %1596 = vmatpush1.msra.mxu0 0.0
        %1597 = vmatprep.subr.mxu0 0.0
        %1598 = vmatpush1.msra.mxu0 0.0
        %1599 = vmatprep.subr.mxu0 0.0
        %1600 = vmatpush1.msra.mxu0 0.0
        %1601 = vmatprep.subr.mxu0 0.0
        %1602 = vmatpush1.msra.mxu0 0.0
        %1603 = vmatprep.subr.mxu0 0.0
        %1604 = vmatpush1.msra.mxu0 0.0
        %1605 = vmatprep.subr.mxu0 0.0
        %1606 = vmatpush1.msra.mxu0 0.0
        %1607 = vmatprep.subr.mxu0 0.0
        %1608 = vmatpush1.msra.mxu0 0.0
        %1609 = vmatprep.subr.mxu0 0.0
        %1610 = vmatpush1.msra.mxu0 0.0
        %1611 = vmatprep.subr.mxu0 0.0
        %1612 = vmatpush1.msra.mxu0 0.0
        %1613 = vmatprep.subr.mxu0 0.0
        %1614 = vmatpush1.msra.mxu0 0.0
        %1615 = vmatprep.subr.mxu0 0.0
        %1616 = vmatpush1.msra.mxu0 0.0
        %1617 = vmatprep.subr.mxu0 0.0
        %1618 = vmatpush1.msra.mxu0 0.0
        %1619 = vmatprep.subr.mxu0 0.0
        %1620 = vmatpush1.msra.mxu0 0.0
        %1621 = vmatprep.subr.mxu0 0.0
        %1622 = vmatpush1.msra.mxu0 0.0
        %1623 = vmatprep.subr.mxu0 0.0
        %1624 = vmatpush1.msra.mxu0 0.0
        %1625 = vmatprep.subr.mxu0 0.0
        %1626 = vmatpush1.msra.mxu0 %v479
        %1627 = vmatprep.subr.mxu0 0.0
        %1628 = vmatpush2.msra.mxu0 0.0
        %1629 = vmatprep.subr.mxu0 0.0
        %1630 = vmatpush2.msra.mxu0 0.0
        %1631 = vmatprep.subr.mxu0 0.0
        %1632 = vmatpush2.msra.mxu0 0.0
        %1633 = vmatprep.subr.mxu0 0.0
        %1634 = vmatpush2.msra.mxu0 0.0
        %1635 = vmatprep.subr.mxu0 0.0
        %1636 = vmatpush2.msra.mxu0 0.0
        %1637 = vmatprep.subr.mxu0 0.0
        %1638 = vmatpush2.msra.mxu0 0.0
        %1639 = vmatprep.subr.mxu0 0.0
        %1640 = vmatpush2.msra.mxu0 0.0
        %1641 = vmatprep.subr.mxu0 0.0
        %1642 = vmatpush2.msra.mxu0 0.0
        %1643 = vmatprep.subr.mxu0 0.0
        %1644 = vmatpush2.msra.mxu0 0.0
        %1645 = vmatprep.subr.mxu0 0.0
        %1646 = vmatpush2.msra.mxu0 0.0
        %1647 = vmatprep.subr.mxu0 0.0
        %1648 = vmatpush2.msra.mxu0 0.0
        %1649 = vmatprep.subr.mxu0 0.0
        %1650 = vmatpush2.msra.mxu0 0.0
        %1651 = vmatprep.subr.mxu0 0.0
        %1652 = vmatpush2.msra.mxu0 0.0
        %1653 = vmatprep.subr.mxu0 0.0
        %1654 = vmatpush2.msra.mxu0 0.0
        %1655 = vmatprep.subr.mxu0 0.0
        %1656 = vmatpush2.msra.mxu0 0.0
        %1657 = vmatprep.subr.mxu0 0.0
        %1658 = vmatpush2.msra.mxu0 0.0
        %1659 = vmatprep.mubr.f32.mxu0 0.0
        %1660 = vmatmul.mubr.f32.gmra.mxu0 %v1593
        %v1661 = vpop.f32.mrf.mxu0
        %v1662 = vadd.f32 0.0, %v1661
        %v1663 = vpop.f32.mrf.mxu0
        %1664 = vdwg.mxu0
        %v1665 = vadd.f32 %v1422, %v1662
        %1666 = vst.msk [vmem:[%s453] sm:$0xff] %vm480, %v1665
        %s1667 = sand.u32 %s204, 1
        %s1668 = scalar_lea.sflag [#allocation4], %s1667
        %s1669 = sand.u32 %s204, 1
        %s1670 = smul.addr %s1669, 8
        %s1671 = scalar_lea.vmem [#allocation14], %s1670
        %s1672 = sand.u32 %s230, 1
        %s1673 = scalar_lea.sflag [#allocation16], %s1672
        %s1674 = sand.u32 %s230, 1
        %s1675 = smul.addr %s1674, 32
        %s1676 = scalar_lea.vmem [#allocation15], %s1675
        // Predicated region
        $region77: #{tpu_custom_call.1} parent=47 // pred_check
          %p1677 = pneg %p214
        $region78: #{tpu_custom_call.1} parent=47 // pred_check_branch
          %1679 = sbr.rel (%p1677) target = $region80
        $region79: #{tpu_custom_call.1} parent=47 // pred_region
          %s1681 = ssub.s32 128, 128
          %1682 = vsyncadd %s1668, %s1681
          %s1683 = smul.addr %s34, 128
          %s1684 = scalar_lea.hbm %s7, %s1683
          %s1686 = sshll.u32 %s1671, 4
          %s1687 = int_to_ptr.vmem [resolvable:$true] %s1686
          %1689 = dma.vmem_to_hbm [thread:$0]  %s1687, 128, %s1684, %s1668
        $region80: #{tpu_custom_call.1} parent=47 // pred_fallthru
          _
        // Predicated region
        $region81: #{tpu_custom_call.1} parent=47 // pred_check
          %p1690 = pneg %p240
        $region82: #{tpu_custom_call.1} parent=47 // pred_check_branch
          %1692 = sbr.rel (%p1690) target = $region84
        $region83: #{tpu_custom_call.1} parent=47 // pred_region
          %s1694 = ssub.s32 512, 512
          %1695 = vsyncadd %s1673, %s1694
          %s1696 = smul.addr %s34, 4
          %s1697 = smul.addr %s1696, 128
          %s1698 = scalar_lea.hbm %s8, %s1697
          %s1699 = sshll.u32 %s1676, 4
          %s1700 = int_to_ptr.vmem [resolvable:$true] %s1699
          %1705 = dma.vmem_to_hbm [thread:$0]  %s1700, 512, %s1698, %s1673, 128, 128, 8
        $region84: #{tpu_custom_call.1} parent=47 // pred_fallthru
          _
      $region48: #{tpu_custom_call.1} parent=5 // pred_fallthru
        _
      %p1706 = scmp.le.s32.totalorder 2, %s29
      // Predicated region
      $region85: #{tpu_custom_call.1} parent=5 // pred_check
        %p1707 = pneg %p1706
      $region86: #{tpu_custom_call.1} parent=5 // pred_check_branch
        %1709 = sbr.rel (%p1707) target = $region88
      $region87: #{tpu_custom_call.1} parent=5 // pred_region
        %s1710 = ssub.s32 %s29, 2
        // Predicated region
        $region89: #{tpu_custom_call.1} parent=87 // pred_check
          %p1711 = pneg %p220
        $region90: #{tpu_custom_call.1} parent=87 // pred_check_branch
          %1713 = sbr.rel (%p1711) target = $region92
        $region91: #{tpu_custom_call.1} parent=87 // pred_region
          %s1714 = sand.u32 %s205, 1
          %s1715 = scalar_lea.sflag [#allocation4], %s1714
          %s1716 = sand.u32 %s205, 1
          %s1717 = smul.addr %s1716, 8
          %s1718 = scalar_lea.vmem [#allocation14], %s1717
          %1719 = dma.done %s1715, 128
        $region92: #{tpu_custom_call.1} parent=87 // pred_fallthru
          _
        // Predicated region
        $region93: #{tpu_custom_call.1} parent=87 // pred_check
          %p1720 = pneg %p246
        $region94: #{tpu_custom_call.1} parent=87 // pred_check_branch
          %1722 = sbr.rel (%p1720) target = $region96
        $region95: #{tpu_custom_call.1} parent=87 // pred_region
          %s1723 = sand.u32 %s231, 1
          %s1724 = scalar_lea.sflag [#allocation16], %s1723
          %s1725 = sand.u32 %s231, 1
          %s1726 = smul.addr %s1725, 32
          %s1727 = scalar_lea.vmem [#allocation15], %s1726
          %1728 = dma.done %s1724, 512
        $region96: #{tpu_custom_call.1} parent=87 // pred_fallthru
          _
      $region88: #{tpu_custom_call.1} parent=5 // pred_fallthru
        _
    $region6: #{tpu_custom_call.1} parent=1 // loop_footer
      %s33 = sadd.s32 1, %s29
    $region7: #{tpu_custom_call.1} parent=1 // loop_footer_branch
      %28 = sbr.rel target = $region3
    $region8: #{tpu_custom_call.1} parent=1 // loop_exit
      _
    %1729 = vsyncpa [#allocation3], 1
    %s1730 = scalar_lea.sflag [#allocation3], 1
    %1731 = vsyncpa %s1730, 1
    %1732 = vsyncpa [#allocation6], 1
    %s1733 = scalar_lea.sflag [#allocation6], 1
    %1734 = vsyncpa %s1733, 1
    %1735 = vsyncpa [#allocation9], 1
    %1736 = vsyncpa [#allocation12], 1
    %1737 = vsyncpa [#allocation4], 1
    %s1738 = scalar_lea.sflag [#allocation4], 1
    %1739 = vsyncpa %s1738, 1
    %1740 = vsyncpa [#allocation16], 1
    %s1741 = scalar_lea.sflag [#allocation16], 1
    %1742 = vsyncpa %s1741, 1

</llo_original>
